<compile_context>
chip_gen: v6e
topology: v6e:2x2x1
jax: 0.10.0
libtpu: 0.0.40
codegen_flags: <defaults>
</compile_context>

<pallas_src>
import jax
import jax.numpy as jnp
import numpy as np
from jax.experimental import pallas as pl
from jax.experimental.pallas import tpu as pltpu

F1, F2, F3 = 4, 8, 16
KSIZE = 3
NUM_CLASSES = 10
IMG = 28  # 28x28 input implied by fc in-features = f3*9


# ----------------------------------------------------------------------------
# One-time weight repacking (init-time glue, outside the hot forward path).
# ----------------------------------------------------------------------------
def _conv_band_matrices(w_hwio, w_in):
    """Per-kh matrices for conv(padding=1) in the (rows=H, lanes=W*Cin) layout.

    Input lane layout :  w * Cin + cin                         (w in [0, w_in))
    Output lane layout:  dw * (Wh*Cout) + w2 * Cout + cout     (conv col = 2*w2+dw)
    so the pool's column max is a contiguous-halves max.  Width zero-padding
    and (for odd w_in) the column dropped by floor pooling are encoded here.
    """
    k, _, cin, cout = w_hwio.shape
    wh = w_in // 2
    lin = w_in * cin
    lout = 2 * wh * cout
    mats = []
    for kh in range(k):
        m = jnp.zeros((lin, lout), jnp.float32)
        for kw in range(k):
            for dw in range(2):
                w2 = np.arange(wh)
                w_out = 2 * w2 + dw
                w_src = w_out + kw - 1  # padding=1
                ok = (w_src >= 0) & (w_src < w_in)
                if not np.any(ok):
                    continue
                w2 = w2[ok]
                w_src = w_src[ok]
                nv = w2.shape[0]
                ci = np.arange(cin)
                co = np.arange(cout)
                rows = (w_src[:, None, None] * cin + ci[None, :, None]
                        + 0 * co[None, None, :])
                cols = (dw * wh * cout + w2[:, None, None] * cout
                        + co[None, None, :] + 0 * ci[None, :, None])
                vals = jnp.broadcast_to(w_hwio[kh, kw][None, :, :], (nv, cin, cout))
                m = m.at[rows.reshape(-1), cols.reshape(-1)].set(vals.reshape(-1))
        mats.append(m)
    return jnp.stack(mats)  # (3, lin, lout)


def _bias_row(b, wh):
    # Bias in the conv-output lane layout (cout fastest): just tile it.
    return jnp.tile(b.astype(jnp.float32), 2 * wh)[None, :]


def _pool_row_selectors(h_in):
    # 0/1 matrices selecting even / odd conv rows (row-pair half of the 2x2 max).
    hh = h_in // 2
    s = np.zeros((2, hh, h_in), np.float32)
    s[0, np.arange(hh), 2 * np.arange(hh)] = 1.0
    s[1, np.arange(hh), 2 * np.arange(hh) + 1] = 1.0
    return jnp.asarray(s)


def _fc_fold(wfc, f3):
    # PyTorch flattens pooled (N, C, 3, 3) in (C, H, W) order; our activation is
    # (rows=h, lanes=w*f3+c).  Fold that permutation into the weight: (3, 3*f3, 10).
    perm = np.zeros((3, 3 * f3), np.int64)
    for h in range(3):
        for w in range(3):
            for c in range(f3):
                perm[h, w * f3 + c] = c * 9 + h * 3 + w
    return wfc[perm]


def prepare_params(params):
    return {
        "m1": _conv_band_matrices(params["w1"], IMG),
        "b1": _bias_row(params["b1"], IMG // 2),
        "s1": _pool_row_selectors(IMG),
        "m2": _conv_band_matrices(params["w2"], IMG // 2),
        "b2": _bias_row(params["b2"], IMG // 4),
        "s2": _pool_row_selectors(IMG // 2),
        "m3": _conv_band_matrices(params["w3"], IMG // 4),
        "b3": _bias_row(params["b3"], IMG // 8),
        "s3": _pool_row_selectors(IMG // 4),
        "wfc": _fc_fold(params["wfc"], F3),
        "bfc": params["bfc"].reshape(1, -1).astype(jnp.float32),
    }


# ----------------------------------------------------------------------------
# Fused Pallas kernel (one image per grid step).
# ----------------------------------------------------------------------------
def _conv_pool(p_ref, h_in, m_ref, b_ref, s_ref, half):
    """conv(padding=1) + bias + 2x2 max-pool + relu, fully VMEM-resident.

    p_ref: (h_in+2, Lin) padded input rows (rows 0 and h_in+1 are zero).
    Returns pooled activation (h_in//2, half) with lane layout w*Cout + cout.
    """
    f32 = jnp.float32
    acc = jnp.dot(p_ref[0:h_in, :], m_ref[0], preferred_element_type=f32)
    acc = acc + jnp.dot(p_ref[1:h_in + 1, :], m_ref[1], preferred_element_type=f32)
    acc = acc + jnp.dot(p_ref[2:h_in + 2, :], m_ref[2], preferred_element_type=f32)
    acc = acc + b_ref[...]
    rows_even = jnp.dot(s_ref[0], acc, preferred_element_type=f32)  # conv rows 0,2,4,..
    rows_odd = jnp.dot(s_ref[1], acc, preferred_element_type=f32)   # conv rows 1,3,5,..
    rmax = jnp.maximum(rows_even, rows_odd)
    pooled = jnp.maximum(rmax[:, :half], rmax[:, half:2 * half])    # even|odd column halves
    return jnp.maximum(pooled, 0.0)                                 # relu (commutes with max)


def _fused_cnn_kernel(x_ref, m1, b1, s1, m2, b2, s2, m3, b3, s3, wfc, bfc,
                      o_ref, p1, p2, p3):
    f32 = jnp.float32
    # conv1: 28x28x1 -> 28x28x4, pool -> (14, 14*4)
    p1[...] = jnp.zeros_like(p1)
    p1[1:IMG + 1, :] = x_ref[...]
    a1 = _conv_pool(p1, IMG, m1, b1, s1, (IMG // 2) * F1)
    # conv2: 14x14x4 -> 14x14x8, pool -> (7, 7*8)
    p2[...] = jnp.zeros_like(p2)
    p2[1:IMG // 2 + 1, :] = a1
    a2 = _conv_pool(p2, IMG // 2, m2, b2, s2, (IMG // 4) * F2)
    # conv3: 7x7x8 -> 7x7x16, pool -> (3, 3*16)
    p3[...] = jnp.zeros_like(p3)
    p3[1:IMG // 4 + 1, :] = a2
    a3 = _conv_pool(p3, IMG // 4, m3, b3, s3, 3 * F3)
    # fc (flatten permutation already folded into wfc)
    logits = bfc[...]
    logits = logits + jnp.dot(a3[0:1, :], wfc[0], preferred_element_type=f32)
    logits = logits + jnp.dot(a3[1:2, :], wfc[1], preferred_element_type=f32)
    logits = logits + jnp.dot(a3[2:3, :], wfc[2], preferred_element_type=f32)
    o_ref[...] = logits.astype(o_ref.dtype)


_PREP_ORDER = ("m1", "b1", "s1", "m2", "b2", "s2", "m3", "b3", "s3", "wfc", "bfc")


def simple_cnn_forward(x_nchw, prep):
    """x_nchw: (N, 1, 28, 28) -> logits (N, 10). One fused pallas_call."""
    n = x_nchw.shape[0]
    weight_args = [prep[k] for k in _PREP_ORDER]

    def const_spec(arr):
        rank = arr.ndim
        return pl.BlockSpec(arr.shape, lambda i, _r=rank: (0,) * _r)

    out = pl.pallas_call(
        _fused_cnn_kernel,
        out_shape=jax.ShapeDtypeStruct((n, 1, NUM_CLASSES), jnp.float32),
        grid=(n,),
        in_specs=[pl.BlockSpec((None, None, IMG, IMG), lambda i: (i, 0, 0, 0))]
                 + [const_spec(a) for a in weight_args],
        out_specs=pl.BlockSpec((None, 1, NUM_CLASSES), lambda i: (i, 0, 0)),
        scratch_shapes=[
            pltpu.VMEM((IMG + 2, IMG * 1), jnp.float32),                 # padded conv1 input
            pltpu.VMEM((IMG // 2 + 2, (IMG // 2) * F1), jnp.float32),    # padded conv2 input
            pltpu.VMEM((IMG // 4 + 2, (IMG // 4) * F2), jnp.float32),    # padded conv3 input
        ],
        compiler_params=pltpu.CompilerParams(dimension_semantics=("parallel",)),
    )(x_nchw.astype(jnp.float32), *weight_args)
    return out.reshape(n, NUM_CLASSES)


# ----------------------------------------------------------------------------
# Deterministic parameter init (PyTorch-style uniform bounds, fixed seed)
# ----------------------------------------------------------------------------
def init_params(key):
    ks = jax.random.split(key, 8)

    def u(k, shape, fan_in):
        bound = 1.0 / np.sqrt(fan_in)
        return jax.random.uniform(k, shape, jnp.float32, -bound, bound)

    k = KSIZE
    return {
        "w1": u(ks[0], (k, k, 1, F1), 1 * k * k),
        "b1": u(ks[1], (F1,), 1 * k * k),
        "w2": u(ks[2], (k, k, F1, F2), F1 * k * k),
        "b2": u(ks[3], (F2,), F1 * k * k),
        "w3": u(ks[4], (k, k, F2, F3), F2 * k * k),
        "b3": u(ks[5], (F3,), F2 * k * k),
        "wfc": u(ks[6], (F3 * 9, NUM_CLASSES), F3 * 9),
        "bfc": u(ks[7], (NUM_CLASSES,), F3 * 9),
    }


# ----------------------------------------------------------------------------
# Pure-JAX reference for validation
# ----------------------------------------------------------------------------
def reference_forward(x_nchw, params):
    x = jnp.transpose(x_nchw, (0, 2, 3, 1)).astype(jnp.float32)

    def conv(x, w, b):
        y = jax.lax.conv_general_dilated(
            x, w, window_strides=(1, 1), padding=((1, 1), (1, 1)),
            dimension_numbers=("NHWC", "HWIO", "NHWC"),
            precision=jax.lax.Precision.HIGHEST)
        return jax.nn.relu(y + b)

    def pool(x):
        n, h, w, c = x.shape
        hh, wh = h // 2, w // 2
        x = x[:, : 2 * hh, : 2 * wh, :].reshape(n, hh, 2, wh, 2, c)
        return x.max(axis=(2, 4))

    x = pool(conv(x, params["w1"], params["b1"]))
    x = pool(conv(x, params["w2"], params["b2"]))
    x = pool(conv(x, params["w3"], params["b3"]))
    n = x.shape[0]
    x = jnp.transpose(x, (0, 3, 1, 2)).reshape(n, -1)
    return (jnp.dot(x, params["wfc"], precision=jax.lax.Precision.HIGHEST)
            + params["bfc"])


if __name__ == "__main__":
    key = jax.random.PRNGKey(0)
    pkey, xkey = jax.random.split(key)
    params = init_params(pkey)
    prep = prepare_params(params)  # one-time weight repack, outside the hot path
    x = jax.random.normal(xkey, (2, 1, 28, 28), jnp.float32)  # NCHW like PyTorch

    fwd = jax.jit(simple_cnn_forward)
    logits = jax.block_until_ready(fwd(x, prep))
    assert logits.shape == (2, NUM_CLASSES)

    ref = reference_forward(x, params)
    np.testing.assert_allclose(
        np.asarray(logits), np.asarray(ref), rtol=1e-3, atol=1e-3
    )
    print("KERNEL_OK")
</pallas_src>

<mosaic_0001>
module attributes {stable_mosaic.version = 11 : i64} {
  func.func @_fused_cnn_kernel(%arg0: i32, %arg1: memref<1x1x28x28xf32, #tpu.memory_space<vmem>>, %arg2: memref<3x28x112xf32, #tpu.memory_space<vmem>>, %arg3: memref<1x112xf32, #tpu.memory_space<vmem>>, %arg4: memref<2x14x28xf32, #tpu.memory_space<vmem>>, %arg5: memref<3x56x112xf32, #tpu.memory_space<vmem>>, %arg6: memref<1x112xf32, #tpu.memory_space<vmem>>, %arg7: memref<2x7x14xf32, #tpu.memory_space<vmem>>, %arg8: memref<3x56x96xf32, #tpu.memory_space<vmem>>, %arg9: memref<1x96xf32, #tpu.memory_space<vmem>>, %arg10: memref<2x3x7xf32, #tpu.memory_space<vmem>>, %arg11: memref<3x48x10xf32, #tpu.memory_space<vmem>>, %arg12: memref<1x10xf32, #tpu.memory_space<vmem>>, %arg13: memref<1x1x10xf32, #tpu.memory_space<vmem>>, %arg14: memref<30x28xf32, #tpu.memory_space<vmem>>, %arg15: memref<16x56xf32, #tpu.memory_space<vmem>>, %arg16: memref<9x56xf32, #tpu.memory_space<vmem>>) attributes {dimension_semantics = [#tpu.dimension_semantics<parallel>], iteration_bounds = array<i64: 2>, scalar_prefetch = 0 : i64, scratch_operands = 3 : i64, tpu.core_type = #tpu.core_type<tc>, window_params = [{transform_indices = @transform_0, window_bounds = array<i64: 1, 1, 28, 28>}, {pipeline_mode = #tpu.pipeline_mode<synchronous>, transform_indices = @transform_1, window_bounds = array<i64: 3, 28, 112>}, {pipeline_mode = #tpu.pipeline_mode<synchronous>, transform_indices = @transform_2, window_bounds = array<i64: 1, 112>}, {pipeline_mode = #tpu.pipeline_mode<synchronous>, transform_indices = @transform_3, window_bounds = array<i64: 2, 14, 28>}, {pipeline_mode = #tpu.pipeline_mode<synchronous>, transform_indices = @transform_4, window_bounds = array<i64: 3, 56, 112>}, {pipeline_mode = #tpu.pipeline_mode<synchronous>, transform_indices = @transform_5, window_bounds = array<i64: 1, 112>}, {pipeline_mode = #tpu.pipeline_mode<synchronous>, transform_indices = @transform_6, window_bounds = array<i64: 2, 7, 14>}, {pipeline_mode = #tpu.pipeline_mode<synchronous>, transform_indices = @transform_7, window_bounds = array<i64: 3, 56, 96>}, {pipeline_mode = #tpu.pipeline_mode<synchronous>, transform_indices = @transform_8, window_bounds = array<i64: 1, 96>}, {pipeline_mode = #tpu.pipeline_mode<synchronous>, transform_indices = @transform_9, window_bounds = array<i64: 2, 3, 7>}, {pipeline_mode = #tpu.pipeline_mode<synchronous>, transform_indices = @transform_10, window_bounds = array<i64: 3, 48, 10>}, {pipeline_mode = #tpu.pipeline_mode<synchronous>, transform_indices = @transform_11, window_bounds = array<i64: 1, 10>}, {transform_indices = @transform_12, window_bounds = array<i64: 1, 1, 10>}]} {
    %cst = arith.constant 0.000000e+00 : f32
    %0 = vector.broadcast %cst : f32 to vector<30x28xf32>
    %c0 = arith.constant 0 : index
    %c0_0 = arith.constant 0 : index
    %1 = vector.load %arg14[%c0, %c0_0] : memref<30x28xf32, #tpu.memory_space<vmem>>, vector<30x28xf32>
    tpu.vector_store %arg14[%c0, %c0_0], %0 {strides = array<i32>} : memref<30x28xf32, #tpu.memory_space<vmem>>, vector<30x28xf32>,
    %c0_1 = arith.constant 0 : index
    %c0_2 = arith.constant 0 : index
    %c0_3 = arith.constant 0 : index
    %c0_4 = arith.constant 0 : index
    %2 = vector.load %arg1[%c0_1, %c0_2, %c0_3, %c0_4] : memref<1x1x28x28xf32, #tpu.memory_space<vmem>>, vector<1x1x28x28xf32>
    %3 = vector.shape_cast %2 : vector<1x1x28x28xf32> to vector<28x28xf32>
    %c1 = arith.constant 1 : index
    %c0_5 = arith.constant 0 : index
    %4 = vector.load %arg14[%c1, %c0_5] : memref<30x28xf32, #tpu.memory_space<vmem>>, vector<28x28xf32>
    tpu.vector_store %arg14[%c1, %c0_5], %3 {strides = array<i32>} : memref<30x28xf32, #tpu.memory_space<vmem>>, vector<28x28xf32>,
    %c0_6 = arith.constant 0 : index
    %c0_7 = arith.constant 0 : index
    %5 = vector.load %arg14[%c0_6, %c0_7] : memref<30x28xf32, #tpu.memory_space<vmem>>, vector<28x28xf32>
    %c0_8 = arith.constant 0 : index
    %c0_9 = arith.constant 0 : index
    %c0_10 = arith.constant 0 : index
    %6 = vector.load %arg2[%c0_8, %c0_9, %c0_10] : memref<3x28x112xf32, #tpu.memory_space<vmem>>, vector<1x28x112xf32>
    %7 = vector.shape_cast %6 : vector<1x28x112xf32> to vector<28x112xf32>
    %cst_11 = arith.constant dense<0.000000e+00> : vector<28x112xf32>
    %8 = tpu.matmul %5, %7, %cst_11 {dimension_numbers = #tpu.dot_dimension_numbers<[1], [0], [0], [1], [0, 0, 1, 1], [], []>} : vector<28x28xf32>, vector<28x112xf32>, vector<28x112xf32> -> vector<28x112xf32>
    %c1_12 = arith.constant 1 : index
    %c0_13 = arith.constant 0 : index
    %9 = vector.load %arg14[%c1_12, %c0_13] : memref<30x28xf32, #tpu.memory_space<vmem>>, vector<28x28xf32>
    %c1_14 = arith.constant 1 : index
    %c0_15 = arith.constant 0 : index
    %c0_16 = arith.constant 0 : index
    %10 = vector.load %arg2[%c1_14, %c0_15, %c0_16] : memref<3x28x112xf32, #tpu.memory_space<vmem>>, vector<1x28x112xf32>
    %11 = vector.shape_cast %10 : vector<1x28x112xf32> to vector<28x112xf32>
    %cst_17 = arith.constant dense<0.000000e+00> : vector<28x112xf32>
    %12 = tpu.matmul %9, %11, %cst_17 {dimension_numbers = #tpu.dot_dimension_numbers<[1], [0], [0], [1], [0, 0, 1, 1], [], []>} : vector<28x28xf32>, vector<28x112xf32>, vector<28x112xf32> -> vector<28x112xf32>
    %13 = arith.addf %8, %12 : vector<28x112xf32>
    %c2 = arith.constant 2 : index
    %c0_18 = arith.constant 0 : index
    %14 = vector.load %arg14[%c2, %c0_18] : memref<30x28xf32, #tpu.memory_space<vmem>>, vector<28x28xf32>
    %c2_19 = arith.constant 2 : index
    %c0_20 = arith.constant 0 : index
    %c0_21 = arith.constant 0 : index
    %15 = vector.load %arg2[%c2_19, %c0_20, %c0_21] : memref<3x28x112xf32, #tpu.memory_space<vmem>>, vector<1x28x112xf32>
    %16 = vector.shape_cast %15 : vector<1x28x112xf32> to vector<28x112xf32>
    %cst_22 = arith.constant dense<0.000000e+00> : vector<28x112xf32>
    %17 = tpu.matmul %14, %16, %cst_22 {dimension_numbers = #tpu.dot_dimension_numbers<[1], [0], [0], [1], [0, 0, 1, 1], [], []>} : vector<28x28xf32>, vector<28x112xf32>, vector<28x112xf32> -> vector<28x112xf32>
    %18 = arith.addf %13, %17 : vector<28x112xf32>
    %c0_23 = arith.constant 0 : index
    %c0_24 = arith.constant 0 : index
    %19 = vector.load %arg3[%c0_23, %c0_24] : memref<1x112xf32, #tpu.memory_space<vmem>>, vector<1x112xf32>
    %20 = vector.broadcast %19 : vector<1x112xf32> to vector<28x112xf32>
    %21 = arith.addf %18, %20 : vector<28x112xf32>
    %c0_25 = arith.constant 0 : index
    %c0_26 = arith.constant 0 : index
    %c0_27 = arith.constant 0 : index
    %22 = vector.load %arg4[%c0_25, %c0_26, %c0_27] : memref<2x14x28xf32, #tpu.memory_space<vmem>>, vector<1x14x28xf32>
    %23 = vector.shape_cast %22 : vector<1x14x28xf32> to vector<14x28xf32>
    %cst_28 = arith.constant dense<0.000000e+00> : vector<14x112xf32>
    %24 = tpu.matmul %23, %21, %cst_28 {dimension_numbers = #tpu.dot_dimension_numbers<[1], [0], [0], [1], [0, 0, 1, 1], [], []>} : vector<14x28xf32>, vector<28x112xf32>, vector<14x112xf32> -> vector<14x112xf32>
    %c1_29 = arith.constant 1 : index
    %c0_30 = arith.constant 0 : index
    %c0_31 = arith.constant 0 : index
    %25 = vector.load %arg4[%c1_29, %c0_30, %c0_31] : memref<2x14x28xf32, #tpu.memory_space<vmem>>, vector<1x14x28xf32>
    %26 = vector.shape_cast %25 : vector<1x14x28xf32> to vector<14x28xf32>
    %cst_32 = arith.constant dense<0.000000e+00> : vector<14x112xf32>
    %27 = tpu.matmul %26, %21, %cst_32 {dimension_numbers = #tpu.dot_dimension_numbers<[1], [0], [0], [1], [0, 0, 1, 1], [], []>} : vector<14x28xf32>, vector<28x112xf32>, vector<14x112xf32> -> vector<14x112xf32>
    %28 = arith.maximumf %24, %27 : vector<14x112xf32>
    %29 = vector.extract_strided_slice %28 {offsets = [0, 0], sizes = [14, 56], strides = [1, 1]} : vector<14x112xf32> to vector<14x56xf32>
    %30 = vector.extract_strided_slice %28 {offsets = [0, 56], sizes = [14, 56], strides = [1, 1]} : vector<14x112xf32> to vector<14x56xf32>
    %31 = arith.maximumf %29, %30 : vector<14x56xf32>
    %cst_33 = arith.constant 0.000000e+00 : f32
    %32 = vector.broadcast %cst_33 : f32 to vector<14x56xf32>
    %33 = arith.maximumf %31, %32 : vector<14x56xf32>
    %cst_34 = arith.constant 0.000000e+00 : f32
    %34 = vector.broadcast %cst_34 : f32 to vector<16x56xf32>
    %c0_35 = arith.constant 0 : index
    %c0_36 = arith.constant 0 : index
    %35 = vector.load %arg15[%c0_35, %c0_36] : memref<16x56xf32, #tpu.memory_space<vmem>>, vector<16x56xf32>
    tpu.vector_store %arg15[%c0_35, %c0_36], %34 {strides = array<i32>} : memref<16x56xf32, #tpu.memory_space<vmem>>, vector<16x56xf32>,
    %c1_37 = arith.constant 1 : index
    %c0_38 = arith.constant 0 : index
    %36 = vector.load %arg15[%c1_37, %c0_38] : memref<16x56xf32, #tpu.memory_space<vmem>>, vector<14x56xf32>
    tpu.vector_store %arg15[%c1_37, %c0_38], %33 {strides = array<i32>} : memref<16x56xf32, #tpu.memory_space<vmem>>, vector<14x56xf32>,
    %c0_39 = arith.constant 0 : index
    %c0_40 = arith.constant 0 : index
    %37 = vector.load %arg15[%c0_39, %c0_40] : memref<16x56xf32, #tpu.memory_space<vmem>>, vector<14x56xf32>
    %c0_41 = arith.constant 0 : index
    %c0_42 = arith.constant 0 : index
    %c0_43 = arith.constant 0 : index
    %38 = vector.load %arg5[%c0_41, %c0_42, %c0_43] : memref<3x56x112xf32, #tpu.memory_space<vmem>>, vector<1x56x112xf32>
    %39 = vector.shape_cast %38 : vector<1x56x112xf32> to vector<56x112xf32>
    %cst_44 = arith.constant dense<0.000000e+00> : vector<14x112xf32>
    %40 = tpu.matmul %37, %39, %cst_44 {dimension_numbers = #tpu.dot_dimension_numbers<[1], [0], [0], [1], [0, 0, 1, 1], [], []>} : vector<14x56xf32>, vector<56x112xf32>, vector<14x112xf32> -> vector<14x112xf32>
    %c1_45 = arith.constant 1 : index
    %c0_46 = arith.constant 0 : index
    %41 = vector.load %arg15[%c1_45, %c0_46] : memref<16x56xf32, #tpu.memory_space<vmem>>, vector<14x56xf32>
    %c1_47 = arith.constant 1 : index
    %c0_48 = arith.constant 0 : index
    %c0_49 = arith.constant 0 : index
    %42 = vector.load %arg5[%c1_47, %c0_48, %c0_49] : memref<3x56x112xf32, #tpu.memory_space<vmem>>, vector<1x56x112xf32>
    %43 = vector.shape_cast %42 : vector<1x56x112xf32> to vector<56x112xf32>
    %cst_50 = arith.constant dense<0.000000e+00> : vector<14x112xf32>
    %44 = tpu.matmul %41, %43, %cst_50 {dimension_numbers = #tpu.dot_dimension_numbers<[1], [0], [0], [1], [0, 0, 1, 1], [], []>} : vector<14x56xf32>, vector<56x112xf32>, vector<14x112xf32> -> vector<14x112xf32>
    %45 = arith.addf %40, %44 : vector<14x112xf32>
    %c2_51 = arith.constant 2 : index
    %c0_52 = arith.constant 0 : index
    %46 = vector.load %arg15[%c2_51, %c0_52] : memref<16x56xf32, #tpu.memory_space<vmem>>, vector<14x56xf32>
    %c2_53 = arith.constant 2 : index
    %c0_54 = arith.constant 0 : index
    %c0_55 = arith.constant 0 : index
    %47 = vector.load %arg5[%c2_53, %c0_54, %c0_55] : memref<3x56x112xf32, #tpu.memory_space<vmem>>, vector<1x56x112xf32>
    %48 = vector.shape_cast %47 : vector<1x56x112xf32> to vector<56x112xf32>
    %cst_56 = arith.constant dense<0.000000e+00> : vector<14x112xf32>
    %49 = tpu.matmul %46, %48, %cst_56 {dimension_numbers = #tpu.dot_dimension_numbers<[1], [0], [0], [1], [0, 0, 1, 1], [], []>} : vector<14x56xf32>, vector<56x112xf32>, vector<14x112xf32> -> vector<14x112xf32>
    %50 = arith.addf %45, %49 : vector<14x112xf32>
    %c0_57 = arith.constant 0 : index
    %c0_58 = arith.constant 0 : index
    %51 = vector.load %arg6[%c0_57, %c0_58] : memref<1x112xf32, #tpu.memory_space<vmem>>, vector<1x112xf32>
    %52 = vector.broadcast %51 : vector<1x112xf32> to vector<14x112xf32>
    %53 = arith.addf %50, %52 : vector<14x112xf32>
    %c0_59 = arith.constant 0 : index
    %c0_60 = arith.constant 0 : index
    %c0_61 = arith.constant 0 : index
    %54 = vector.load %arg7[%c0_59, %c0_60, %c0_61] : memref<2x7x14xf32, #tpu.memory_space<vmem>>, vector<1x7x14xf32>
    %55 = vector.shape_cast %54 : vector<1x7x14xf32> to vector<7x14xf32>
    %cst_62 = arith.constant dense<0.000000e+00> : vector<7x112xf32>
    %56 = tpu.matmul %55, %53, %cst_62 {dimension_numbers = #tpu.dot_dimension_numbers<[1], [0], [0], [1], [0, 0, 1, 1], [], []>} : vector<7x14xf32>, vector<14x112xf32>, vector<7x112xf32> -> vector<7x112xf32>
    %c1_63 = arith.constant 1 : index
    %c0_64 = arith.constant 0 : index
    %c0_65 = arith.constant 0 : index
    %57 = vector.load %arg7[%c1_63, %c0_64, %c0_65] : memref<2x7x14xf32, #tpu.memory_space<vmem>>, vector<1x7x14xf32>
    %58 = vector.shape_cast %57 : vector<1x7x14xf32> to vector<7x14xf32>
    %cst_66 = arith.constant dense<0.000000e+00> : vector<7x112xf32>
    %59 = tpu.matmul %58, %53, %cst_66 {dimension_numbers = #tpu.dot_dimension_numbers<[1], [0], [0], [1], [0, 0, 1, 1], [], []>} : vector<7x14xf32>, vector<14x112xf32>, vector<7x112xf32> -> vector<7x112xf32>
    %60 = arith.maximumf %56, %59 : vector<7x112xf32>
    %61 = vector.extract_strided_slice %60 {offsets = [0, 0], sizes = [7, 56], strides = [1, 1]} : vector<7x112xf32> to vector<7x56xf32>
    %62 = vector.extract_strided_slice %60 {offsets = [0, 56], sizes = [7, 56], strides = [1, 1]} : vector<7x112xf32> to vector<7x56xf32>
    %63 = arith.maximumf %61, %62 : vector<7x56xf32>
    %cst_67 = arith.constant 0.000000e+00 : f32
    %64 = vector.broadcast %cst_67 : f32 to vector<7x56xf32>
    %65 = arith.maximumf %63, %64 : vector<7x56xf32>
    %cst_68 = arith.constant 0.000000e+00 : f32
    %66 = vector.broadcast %cst_68 : f32 to vector<9x56xf32>
    %c0_69 = arith.constant 0 : index
    %c0_70 = arith.constant 0 : index
    %67 = vector.load %arg16[%c0_69, %c0_70] : memref<9x56xf32, #tpu.memory_space<vmem>>, vector<9x56xf32>
    tpu.vector_store %arg16[%c0_69, %c0_70], %66 {strides = array<i32>} : memref<9x56xf32, #tpu.memory_space<vmem>>, vector<9x56xf32>,
    %c1_71 = arith.constant 1 : index
    %c0_72 = arith.constant 0 : index
    %68 = vector.load %arg16[%c1_71, %c0_72] : memref<9x56xf32, #tpu.memory_space<vmem>>, vector<7x56xf32>
    tpu.vector_store %arg16[%c1_71, %c0_72], %65 {strides = array<i32>} : memref<9x56xf32, #tpu.memory_space<vmem>>, vector<7x56xf32>,
    %c0_73 = arith.constant 0 : index
    %c0_74 = arith.constant 0 : index
    %69 = vector.load %arg16[%c0_73, %c0_74] : memref<9x56xf32, #tpu.memory_space<vmem>>, vector<7x56xf32>
    %c0_75 = arith.constant 0 : index
    %c0_76 = arith.constant 0 : index
    %c0_77 = arith.constant 0 : index
    %70 = vector.load %arg8[%c0_75, %c0_76, %c0_77] : memref<3x56x96xf32, #tpu.memory_space<vmem>>, vector<1x56x96xf32>
    %71 = vector.shape_cast %70 : vector<1x56x96xf32> to vector<56x96xf32>
    %cst_78 = arith.constant dense<0.000000e+00> : vector<7x96xf32>
    %72 = tpu.matmul %69, %71, %cst_78 {dimension_numbers = #tpu.dot_dimension_numbers<[1], [0], [0], [1], [0, 0, 1, 1], [], []>} : vector<7x56xf32>, vector<56x96xf32>, vector<7x96xf32> -> vector<7x96xf32>
    %c1_79 = arith.constant 1 : index
    %c0_80 = arith.constant 0 : index
    %73 = vector.load %arg16[%c1_79, %c0_80] : memref<9x56xf32, #tpu.memory_space<vmem>>, vector<7x56xf32>
    %c1_81 = arith.constant 1 : index
    %c0_82 = arith.constant 0 : index
    %c0_83 = arith.constant 0 : index
    %74 = vector.load %arg8[%c1_81, %c0_82, %c0_83] : memref<3x56x96xf32, #tpu.memory_space<vmem>>, vector<1x56x96xf32>
    %75 = vector.shape_cast %74 : vector<1x56x96xf32> to vector<56x96xf32>
    %cst_84 = arith.constant dense<0.000000e+00> : vector<7x96xf32>
    %76 = tpu.matmul %73, %75, %cst_84 {dimension_numbers = #tpu.dot_dimension_numbers<[1], [0], [0], [1], [0, 0, 1, 1], [], []>} : vector<7x56xf32>, vector<56x96xf32>, vector<7x96xf32> -> vector<7x96xf32>
    %77 = arith.addf %72, %76 : vector<7x96xf32>
    %c2_85 = arith.constant 2 : index
    %c0_86 = arith.constant 0 : index
    %78 = vector.load %arg16[%c2_85, %c0_86] : memref<9x56xf32, #tpu.memory_space<vmem>>, vector<7x56xf32>
    %c2_87 = arith.constant 2 : index
    %c0_88 = arith.constant 0 : index
    %c0_89 = arith.constant 0 : index
    %79 = vector.load %arg8[%c2_87, %c0_88, %c0_89] : memref<3x56x96xf32, #tpu.memory_space<vmem>>, vector<1x56x96xf32>
    %80 = vector.shape_cast %79 : vector<1x56x96xf32> to vector<56x96xf32>
    %cst_90 = arith.constant dense<0.000000e+00> : vector<7x96xf32>
    %81 = tpu.matmul %78, %80, %cst_90 {dimension_numbers = #tpu.dot_dimension_numbers<[1], [0], [0], [1], [0, 0, 1, 1], [], []>} : vector<7x56xf32>, vector<56x96xf32>, vector<7x96xf32> -> vector<7x96xf32>
    %82 = arith.addf %77, %81 : vector<7x96xf32>
    %c0_91 = arith.constant 0 : index
    %c0_92 = arith.constant 0 : index
    %83 = vector.load %arg9[%c0_91, %c0_92] : memref<1x96xf32, #tpu.memory_space<vmem>>, vector<1x96xf32>
    %84 = vector.broadcast %83 : vector<1x96xf32> to vector<7x96xf32>
    %85 = arith.addf %82, %84 : vector<7x96xf32>
    %c0_93 = arith.constant 0 : index
    %c0_94 = arith.constant 0 : index
    %c0_95 = arith.constant 0 : index
    %86 = vector.load %arg10[%c0_93, %c0_94, %c0_95] : memref<2x3x7xf32, #tpu.memory_space<vmem>>, vector<1x3x7xf32>
    %87 = vector.shape_cast %86 : vector<1x3x7xf32> to vector<3x7xf32>
    %cst_96 = arith.constant dense<0.000000e+00> : vector<3x96xf32>
    %88 = tpu.matmul %87, %85, %cst_96 {dimension_numbers = #tpu.dot_dimension_numbers<[1], [0], [0], [1], [0, 0, 1, 1], [], []>} : vector<3x7xf32>, vector<7x96xf32>, vector<3x96xf32> -> vector<3x96xf32>
    %c1_97 = arith.constant 1 : index
    %c0_98 = arith.constant 0 : index
    %c0_99 = arith.constant 0 : index
    %89 = vector.load %arg10[%c1_97, %c0_98, %c0_99] : memref<2x3x7xf32, #tpu.memory_space<vmem>>, vector<1x3x7xf32>
    %90 = vector.shape_cast %89 : vector<1x3x7xf32> to vector<3x7xf32>
    %cst_100 = arith.constant dense<0.000000e+00> : vector<3x96xf32>
    %91 = tpu.matmul %90, %85, %cst_100 {dimension_numbers = #tpu.dot_dimension_numbers<[1], [0], [0], [1], [0, 0, 1, 1], [], []>} : vector<3x7xf32>, vector<7x96xf32>, vector<3x96xf32> -> vector<3x96xf32>
    %92 = arith.maximumf %88, %91 : vector<3x96xf32>
    %93 = vector.extract_strided_slice %92 {offsets = [0, 0], sizes = [3, 48], strides = [1, 1]} : vector<3x96xf32> to vector<3x48xf32>
    %94 = vector.extract_strided_slice %92 {offsets = [0, 48], sizes = [3, 48], strides = [1, 1]} : vector<3x96xf32> to vector<3x48xf32>
    %95 = arith.maximumf %93, %94 : vector<3x48xf32>
    %cst_101 = arith.constant 0.000000e+00 : f32
    %96 = vector.broadcast %cst_101 : f32 to vector<3x48xf32>
    %97 = arith.maximumf %95, %96 : vector<3x48xf32>
    %c0_102 = arith.constant 0 : index
    %c0_103 = arith.constant 0 : index
    %98 = vector.load %arg12[%c0_102, %c0_103] : memref<1x10xf32, #tpu.memory_space<vmem>>, vector<1x10xf32>
    %99 = vector.extract_strided_slice %97 {offsets = [0, 0], sizes = [1, 48], strides = [1, 1]} : vector<3x48xf32> to vector<1x48xf32>
    %c0_104 = arith.constant 0 : index
    %c0_105 = arith.constant 0 : index
    %c0_106 = arith.constant 0 : index
    %100 = vector.load %arg11[%c0_104, %c0_105, %c0_106] : memref<3x48x10xf32, #tpu.memory_space<vmem>>, vector<1x48x10xf32>
    %101 = vector.shape_cast %100 : vector<1x48x10xf32> to vector<48x10xf32>
    %cst_107 = arith.constant dense<0.000000e+00> : vector<1x10xf32>
    %102 = tpu.matmul %99, %101, %cst_107 {dimension_numbers = #tpu.dot_dimension_numbers<[1], [0], [0], [1], [0, 0, 1, 1], [], []>} : vector<1x48xf32>, vector<48x10xf32>, vector<1x10xf32> -> vector<1x10xf32>
    %103 = arith.addf %98, %102 : vector<1x10xf32>
    %104 = vector.extract_strided_slice %97 {offsets = [1, 0], sizes = [1, 48], strides = [1, 1]} : vector<3x48xf32> to vector<1x48xf32>
    %c1_108 = arith.constant 1 : index
    %c0_109 = arith.constant 0 : index
    %c0_110 = arith.constant 0 : index
    %105 = vector.load %arg11[%c1_108, %c0_109, %c0_110] : memref<3x48x10xf32, #tpu.memory_space<vmem>>, vector<1x48x10xf32>
    %106 = vector.shape_cast %105 : vector<1x48x10xf32> to vector<48x10xf32>
    %cst_111 = arith.constant dense<0.000000e+00> : vector<1x10xf32>
    %107 = tpu.matmul %104, %106, %cst_111 {dimension_numbers = #tpu.dot_dimension_numbers<[1], [0], [0], [1], [0, 0, 1, 1], [], []>} : vector<1x48xf32>, vector<48x10xf32>, vector<1x10xf32> -> vector<1x10xf32>
    %108 = arith.addf %103, %107 : vector<1x10xf32>
    %109 = vector.extract_strided_slice %97 {offsets = [2, 0], sizes = [1, 48], strides = [1, 1]} : vector<3x48xf32> to vector<1x48xf32>
    %c2_112 = arith.constant 2 : index
    %c0_113 = arith.constant 0 : index
    %c0_114 = arith.constant 0 : index
    %110 = vector.load %arg11[%c2_112, %c0_113, %c0_114] : memref<3x48x10xf32, #tpu.memory_space<vmem>>, vector<1x48x10xf32>
    %111 = vector.shape_cast %110 : vector<1x48x10xf32> to vector<48x10xf32>
    %cst_115 = arith.constant dense<0.000000e+00> : vector<1x10xf32>
    %112 = tpu.matmul %109, %111, %cst_115 {dimension_numbers = #tpu.dot_dimension_numbers<[1], [0], [0], [1], [0, 0, 1, 1], [], []>} : vector<1x48xf32>, vector<48x10xf32>, vector<1x10xf32> -> vector<1x10xf32>
    %113 = arith.addf %108, %112 : vector<1x10xf32>
    %c0_116 = arith.constant 0 : index
    %c0_117 = arith.constant 0 : index
    %c0_118 = arith.constant 0 : index
    %114 = vector.load %arg13[%c0_116, %c0_117, %c0_118] : memref<1x1x10xf32, #tpu.memory_space<vmem>>, vector<1x1x10xf32>
    %115 = vector.shape_cast %114 : vector<1x1x10xf32> to vector<1x10xf32>
    %116 = vector.shape_cast %113 : vector<1x10xf32> to vector<1x1x10xf32>
    tpu.vector_store %arg13[%c0_116, %c0_117, %c0_118], %116 {strides = array<i32>} : memref<1x1x10xf32, #tpu.memory_space<vmem>>, vector<1x1x10xf32>,
    return
  }
  func.func @transform_0(%arg0: i32) -> (i32, i32, i32, i32) {
    %c0_i32 = arith.constant 0 : i32
    %c0_i32_0 = arith.constant 0 : i32
    %c0_i32_1 = arith.constant 0 : i32
    %c0_i32_2 = arith.constant 0 : i32
    return %arg0, %c0_i32, %c0_i32_0, %c0_i32_1 : i32, i32, i32, i32
  }
  func.func @transform_1(%arg0: i32) -> (i32, i32, i32) {
    %c0_i32 = arith.constant 0 : i32
    %c0_i32_0 = arith.constant 0 : i32
    %c0_i32_1 = arith.constant 0 : i32
    %c0_i32_2 = arith.constant 0 : i32
    return %c0_i32, %c0_i32_0, %c0_i32_1 : i32, i32, i32
  }
  func.func @transform_2(%arg0: i32) -> (i32, i32) {
    %c0_i32 = arith.constant 0 : i32
    %c0_i32_0 = arith.constant 0 : i32
    %c0_i32_1 = arith.constant 0 : i32
    return %c0_i32, %c0_i32_0 : i32, i32
  }
  func.func @transform_3(%arg0: i32) -> (i32, i32, i32) {
    %c0_i32 = arith.constant 0 : i32
    %c0_i32_0 = arith.constant 0 : i32
    %c0_i32_1 = arith.constant 0 : i32
    %c0_i32_2 = arith.constant 0 : i32
    return %c0_i32, %c0_i32_0, %c0_i32_1 : i32, i32, i32
  }
  func.func @transform_4(%arg0: i32) -> (i32, i32, i32) {
    %c0_i32 = arith.constant 0 : i32
    %c0_i32_0 = arith.constant 0 : i32
    %c0_i32_1 = arith.constant 0 : i32
    %c0_i32_2 = arith.constant 0 : i32
    return %c0_i32, %c0_i32_0, %c0_i32_1 : i32, i32, i32
  }
  func.func @transform_5(%arg0: i32) -> (i32, i32) {
    %c0_i32 = arith.constant 0 : i32
    %c0_i32_0 = arith.constant 0 : i32
    %c0_i32_1 = arith.constant 0 : i32
    return %c0_i32, %c0_i32_0 : i32, i32
  }
  func.func @transform_6(%arg0: i32) -> (i32, i32, i32) {
    %c0_i32 = arith.constant 0 : i32
    %c0_i32_0 = arith.constant 0 : i32
    %c0_i32_1 = arith.constant 0 : i32
    %c0_i32_2 = arith.constant 0 : i32
    return %c0_i32, %c0_i32_0, %c0_i32_1 : i32, i32, i32
  }
  func.func @transform_7(%arg0: i32) -> (i32, i32, i32) {
    %c0_i32 = arith.constant 0 : i32
    %c0_i32_0 = arith.constant 0 : i32
    %c0_i32_1 = arith.constant 0 : i32
    %c0_i32_2 = arith.constant 0 : i32
    return %c0_i32, %c0_i32_0, %c0_i32_1 : i32, i32, i32
  }
  func.func @transform_8(%arg0: i32) -> (i32, i32) {
    %c0_i32 = arith.constant 0 : i32
    %c0_i32_0 = arith.constant 0 : i32
    %c0_i32_1 = arith.constant 0 : i32
    return %c0_i32, %c0_i32_0 : i32, i32
  }
  func.func @transform_9(%arg0: i32) -> (i32, i32, i32) {
    %c0_i32 = arith.constant 0 : i32
    %c0_i32_0 = arith.constant 0 : i32
    %c0_i32_1 = arith.constant 0 : i32
    %c0_i32_2 = arith.constant 0 : i32
    return %c0_i32, %c0_i32_0, %c0_i32_1 : i32, i32, i32
  }
  func.func @transform_10(%arg0: i32) -> (i32, i32, i32) {
    %c0_i32 = arith.constant 0 : i32
    %c0_i32_0 = arith.constant 0 : i32
    %c0_i32_1 = arith.constant 0 : i32
    %c0_i32_2 = arith.constant 0 : i32
    return %c0_i32, %c0_i32_0, %c0_i32_1 : i32, i32, i32
  }
  func.func @transform_11(%arg0: i32) -> (i32, i32) {
    %c0_i32 = arith.constant 0 : i32
    %c0_i32_0 = arith.constant 0 : i32
    %c0_i32_1 = arith.constant 0 : i32
    return %c0_i32, %c0_i32_0 : i32, i32
  }
  func.func @transform_12(%arg0: i32) -> (i32, i32, i32) {
    %c0_i32 = arith.constant 0 : i32
    %c0_i32_0 = arith.constant 0 : i32
    %c0_i32_1 = arith.constant 0 : i32
    return %arg0, %c0_i32, %c0_i32_0 : i32, i32, i32
  }
}

</mosaic_0001>

<llo_original>
// kernel: simple_cnn_forward.1
$region0: #{simple_cnn_forward.1}
  #allocation0 [shape = 'u32[]', space=smem, size = 0x4, offset = 0x4, fixed_abs, tag = 'smem constant byte address 0x4 - core index']
  #allocation1 [shape = 'u32[144,128]{1,0:T(1,128)}', space=vmem, size = 0x12000, scoped, tag = 'internal scratch']
  #allocation2 [shape = 'f32[30,28]{1,0:T(8,128)}', space=vmem, size = 0x4000, scoped, tag = 'scratch operand']
  #allocation3 [shape = 'f32[16,56]{1,0:T(8,128)}', space=vmem, size = 0x2000, scoped, tag = 'scratch operand']
  #allocation4 [shape = 'f32[9,56]{1,0:T(8,128)}', space=vmem, size = 0x2000, scoped, tag = 'scratch operand']
  %s0 = inlined_call_operand.vmem [shape: f32[2,1,28,28], index: 0, kind: input, shape index: {}]
  %s1 = inlined_call_operand.hbm [shape: f32[3,28,112], index: 1, kind: input, shape index: {}]
  %s2 = inlined_call_operand.hbm [shape: f32[1,112], index: 2, kind: input, shape index: {}]
  %s3 = inlined_call_operand.vmem [shape: f32[2,14,28], index: 3, kind: input, shape index: {}]
  %s4 = inlined_call_operand.vmem [shape: f32[3,56,112], index: 4, kind: input, shape index: {}]
  %s5 = inlined_call_operand.hbm [shape: f32[1,112], index: 5, kind: input, shape index: {}]
  %s6 = inlined_call_operand.vmem [shape: f32[2,7,14], index: 6, kind: input, shape index: {}]
  %s7 = inlined_call_operand.vmem [shape: f32[3,56,96], index: 7, kind: input, shape index: {}]
  %s8 = inlined_call_operand.hbm [shape: f32[1,96], index: 8, kind: input, shape index: {}]
  %s9 = inlined_call_operand.vmem [shape: f32[2,3,7], index: 9, kind: input, shape index: {}]
  %s10 = inlined_call_operand.vmem [shape: f32[3,48,10], index: 10, kind: input, shape index: {}]
  %s11 = inlined_call_operand.hbm [shape: f32[1,10], index: 11, kind: input, shape index: {}]
  %s12 = inlined_call_operand.hbm [shape: f32[2,1,10], index: 12, kind: output, shape index: {}]
  %s13 = sld [smem:[#allocation0]]
  $region101: #{simple_cnn_forward.1} parent=0
    _
  %s15 = ssub.s32 1, %s13
  %s16 = scalar_select 0, %s15, %s13
  $region1: #{simple_cnn_forward.1} parent=0
    #allocation5 [shape = 'u8[49152]{0}', space=vmem, size = 0xc000, scoped, tag = 'input window, operand 1, single buffered']
    #allocation6 [shape = 's32[2]{0}', space=sflag, size = 0x8, scoped, tag = 'scoped memory for simple_cnn_forward.1']
    #allocation7 [shape = 's32[2]{0}', space=sflag, size = 0x8, scoped, tag = 'scoped memory for simple_cnn_forward.1']
    #allocation8 [shape = 'u8[512]{0}', space=vmem, size = 0x400, scoped, tag = 'input window, operand 2, single buffered']
    #allocation9 [shape = 's32[1]{0}', space=sflag, size = 0x4, scoped, tag = 'scoped memory for simple_cnn_forward.1']
    #allocation10 [shape = 'u8[512]{0}', space=vmem, size = 0x400, scoped, tag = 'input window, operand 5, single buffered']
    #allocation11 [shape = 'u8[512]{0}', space=vmem, size = 0x400, scoped, tag = 'input window, operand 8, single buffered']
    #allocation12 [shape = 's32[1]{0}', space=sflag, size = 0x4, scoped, tag = 'scoped memory for simple_cnn_forward.1']
    #allocation13 [shape = 'u8[512]{0}', space=vmem, size = 0x400, scoped, tag = 'input window, operand 11, single buffered']
    #allocation14 [shape = 'u8[1024]{0}', space=vmem, size = 0x400, scoped, tag = 'output window, operand 0']
    %17 = vsyncpa [#allocation6], 0
    %18 = vsyncpa [#allocation9], 0
    %19 = vsyncpa [#allocation12], 0
    %20 = vsyncpa [#allocation7], 0
    %s21 = scalar_lea.sflag [#allocation7], 1
    %22 = vsyncpa %s21, 0
    loop: start=0, step=1, limit=4
    $region2: #{simple_cnn_forward.1} parent=1 // loop_pre_header
      _
    $region3: #{simple_cnn_forward.1} parent=1 // loop_header
      %s24 = sphi 0, %s28
      %p25 = scmp.ge.s32.totalorder %s24, 4
      %s34 = sphi 0, %s36
      %s37 = sphi 0, %s34
      %s38 = sphi 0, %s37
      %s54 = sphi 0, %s38
      %s58 = sphi 0, %s58
      %s60 = sphi 0, %s58
      %s61 = sphi 0, %s60
      %s75 = sphi 0, %s61
      %s79 = sphi 0, %s79
      %s81 = sphi 0, %s79
      %s82 = sphi 0, %s81
      %s96 = sphi 0, %s82
      %s100 = sphi 0, %s100
      %s102 = sphi 0, %s100
      %s103 = sphi 0, %s102
      %s117 = sphi 0, %s103
      %s121 = sphi 0, %s121
      %s123 = sphi 0, %s121
      %s124 = sphi 0, %s123
      %s138 = sphi 0, %s124
      %s142 = sphi 0, %s142
      %s144 = sphi 0, %s142
      %s145 = sphi 0, %s144
      %s159 = sphi 0, %s145
      %s163 = sphi 0, %s163
      %s165 = sphi 0, %s163
      %s166 = sphi 0, %s165
      %s180 = sphi 0, %s166
      %s184 = sphi 0, %s184
      %s186 = sphi 0, %s184
      %s187 = sphi 0, %s186
      %s201 = sphi 0, %s187
      %s205 = sphi 0, %s205
      %s207 = sphi 0, %s205
      %s208 = sphi 0, %s207
      %s222 = sphi 0, %s208
      %s226 = sphi 0, %s226
      %s228 = sphi 0, %s226
      %s229 = sphi 0, %s228
      %s243 = sphi 0, %s229
      %s247 = sphi 0, %s247
      %s249 = sphi 0, %s247
      %s250 = sphi 0, %s249
      %s264 = sphi 0, %s250
      %s268 = sphi 0, %s268
      %s270 = sphi 0, %s268
      %s271 = sphi 0, %s270
      %s285 = sphi 0, %s271
      %s291 = sphi 0, %s293
      %s294 = sphi 0, %s291
      %s295 = sphi 0, %s294
      %s311 = sphi 0, %s295
    $region4: #{simple_cnn_forward.1} parent=1 // loop_header_branch
      %27 = sbr.rel (%p25) target = $region8
    $region5: #{simple_cnn_forward.1} parent=1 // loop_body
      %s29 = ssub.s32 %s24, 1
      %s30 = ssub.s32 %s24, 2
      %s31 = sadd.s32 %s24, 1
      %s32 = ssub.s32 %s24, %s31
      %p33 = scmp.eq.s32.totalorder %s32, 0
      %s35 = sadd.s32 %s34, 1
      %s36 = scalar_select %p33, %s34, %s35
      %p39 = pneg %p33
      %p40 = scmp.eq.s32.totalorder %s24, 1
      %p41 = por %p39, %p40
      %p42 = scmp.ne.s32.totalorder %s34, %s37
      %p43 = scmp.eq.s32.totalorder %s24, 0
      %p44 = por %p42, %p43
      %p45 = scmp.ne.s32.totalorder %s34, %s37
      %p46 = scmp.eq.s32.totalorder %s29, 1
      %p47 = por %p45, %p46
      %p48 = scmp.ne.s32.totalorder %s37, %s38
      %p49 = scmp.eq.s32.totalorder %s29, 0
      %p50 = por %p48, %p49
      %p51 = scmp.ne.s32.totalorder %s37, %s38
      %p52 = scmp.eq.s32.totalorder %s30, 1
      %p53 = por %p51, %p52
      %p55 = scmp.ne.s32.totalorder %s38, %s54
      %p56 = scmp.eq.s32.totalorder %s30, 0
      %p57 = por %p55, %p56
      %s59 = sadd.s32 %s58, 1
      %p62 = scmp.eq.s32.totalorder %s24, 1
      %p63 = scmp.ne.s32.totalorder %s58, %s60
      %p64 = scmp.eq.s32.totalorder %s24, 0
      %p65 = por %p63, %p64
      %p66 = scmp.ne.s32.totalorder %s58, %s60
      %p67 = scmp.eq.s32.totalorder %s29, 1
      %p68 = por %p66, %p67
      %p69 = scmp.ne.s32.totalorder %s60, %s61
      %p70 = scmp.eq.s32.totalorder %s29, 0
      %p71 = por %p69, %p70
      %p72 = scmp.ne.s32.totalorder %s60, %s61
      %p73 = scmp.eq.s32.totalorder %s30, 1
      %p74 = por %p72, %p73
      %p76 = scmp.ne.s32.totalorder %s61, %s75
      %p77 = scmp.eq.s32.totalorder %s30, 0
      %p78 = por %p76, %p77
      %s80 = sadd.s32 %s79, 1
      %p83 = scmp.eq.s32.totalorder %s24, 1
      %p84 = scmp.ne.s32.totalorder %s79, %s81
      %p85 = scmp.eq.s32.totalorder %s24, 0
      %p86 = por %p84, %p85
      %p87 = scmp.ne.s32.totalorder %s79, %s81
      %p88 = scmp.eq.s32.totalorder %s29, 1
      %p89 = por %p87, %p88
      %p90 = scmp.ne.s32.totalorder %s81, %s82
      %p91 = scmp.eq.s32.totalorder %s29, 0
      %p92 = por %p90, %p91
      %p93 = scmp.ne.s32.totalorder %s81, %s82
      %p94 = scmp.eq.s32.totalorder %s30, 1
      %p95 = por %p93, %p94
      %p97 = scmp.ne.s32.totalorder %s82, %s96
      %p98 = scmp.eq.s32.totalorder %s30, 0
      %p99 = por %p97, %p98
      %s101 = sadd.s32 %s100, 1
      %p104 = scmp.eq.s32.totalorder %s24, 1
      %p105 = scmp.ne.s32.totalorder %s100, %s102
      %p106 = scmp.eq.s32.totalorder %s24, 0
      %p107 = por %p105, %p106
      %p108 = scmp.ne.s32.totalorder %s100, %s102
      %p109 = scmp.eq.s32.totalorder %s29, 1
      %p110 = por %p108, %p109
      %p111 = scmp.ne.s32.totalorder %s102, %s103
      %p112 = scmp.eq.s32.totalorder %s29, 0
      %p113 = por %p111, %p112
      %p114 = scmp.ne.s32.totalorder %s102, %s103
      %p115 = scmp.eq.s32.totalorder %s30, 1
      %p116 = por %p114, %p115
      %p118 = scmp.ne.s32.totalorder %s103, %s117
      %p119 = scmp.eq.s32.totalorder %s30, 0
      %p120 = por %p118, %p119
      %s122 = sadd.s32 %s121, 1
      %p125 = scmp.eq.s32.totalorder %s24, 1
      %p126 = scmp.ne.s32.totalorder %s121, %s123
      %p127 = scmp.eq.s32.totalorder %s24, 0
      %p128 = por %p126, %p127
      %p129 = scmp.ne.s32.totalorder %s121, %s123
      %p130 = scmp.eq.s32.totalorder %s29, 1
      %p131 = por %p129, %p130
      %p132 = scmp.ne.s32.totalorder %s123, %s124
      %p133 = scmp.eq.s32.totalorder %s29, 0
      %p134 = por %p132, %p133
      %p135 = scmp.ne.s32.totalorder %s123, %s124
      %p136 = scmp.eq.s32.totalorder %s30, 1
      %p137 = por %p135, %p136
      %p139 = scmp.ne.s32.totalorder %s124, %s138
      %p140 = scmp.eq.s32.totalorder %s30, 0
      %p141 = por %p139, %p140
      %s143 = sadd.s32 %s142, 1
      %p146 = scmp.eq.s32.totalorder %s24, 1
      %p147 = scmp.ne.s32.totalorder %s142, %s144
      %p148 = scmp.eq.s32.totalorder %s24, 0
      %p149 = por %p147, %p148
      %p150 = scmp.ne.s32.totalorder %s142, %s144
      %p151 = scmp.eq.s32.totalorder %s29, 1
      %p152 = por %p150, %p151
      %p153 = scmp.ne.s32.totalorder %s144, %s145
      %p154 = scmp.eq.s32.totalorder %s29, 0
      %p155 = por %p153, %p154
      %p156 = scmp.ne.s32.totalorder %s144, %s145
      %p157 = scmp.eq.s32.totalorder %s30, 1
      %p158 = por %p156, %p157
      %p160 = scmp.ne.s32.totalorder %s145, %s159
      %p161 = scmp.eq.s32.totalorder %s30, 0
      %p162 = por %p160, %p161
      %s164 = sadd.s32 %s163, 1
      %p167 = scmp.eq.s32.totalorder %s24, 1
      %p168 = scmp.ne.s32.totalorder %s163, %s165
      %p169 = scmp.eq.s32.totalorder %s24, 0
      %p170 = por %p168, %p169
      %p171 = scmp.ne.s32.totalorder %s163, %s165
      %p172 = scmp.eq.s32.totalorder %s29, 1
      %p173 = por %p171, %p172
      %p174 = scmp.ne.s32.totalorder %s165, %s166
      %p175 = scmp.eq.s32.totalorder %s29, 0
      %p176 = por %p174, %p175
      %p177 = scmp.ne.s32.totalorder %s165, %s166
      %p178 = scmp.eq.s32.totalorder %s30, 1
      %p179 = por %p177, %p178
      %p181 = scmp.ne.s32.totalorder %s166, %s180
      %p182 = scmp.eq.s32.totalorder %s30, 0
      %p183 = por %p181, %p182
      %s185 = sadd.s32 %s184, 1
      %p188 = scmp.eq.s32.totalorder %s24, 1
      %p189 = scmp.ne.s32.totalorder %s184, %s186
      %p190 = scmp.eq.s32.totalorder %s24, 0
      %p191 = por %p189, %p190
      %p192 = scmp.ne.s32.totalorder %s184, %s186
      %p193 = scmp.eq.s32.totalorder %s29, 1
      %p194 = por %p192, %p193
      %p195 = scmp.ne.s32.totalorder %s186, %s187
      %p196 = scmp.eq.s32.totalorder %s29, 0
      %p197 = por %p195, %p196
      %p198 = scmp.ne.s32.totalorder %s186, %s187
      %p199 = scmp.eq.s32.totalorder %s30, 1
      %p200 = por %p198, %p199
      %p202 = scmp.ne.s32.totalorder %s187, %s201
      %p203 = scmp.eq.s32.totalorder %s30, 0
      %p204 = por %p202, %p203
      %s206 = sadd.s32 %s205, 1
      %p209 = scmp.eq.s32.totalorder %s24, 1
      %p210 = scmp.ne.s32.totalorder %s205, %s207
      %p211 = scmp.eq.s32.totalorder %s24, 0
      %p212 = por %p210, %p211
      %p213 = scmp.ne.s32.totalorder %s205, %s207
      %p214 = scmp.eq.s32.totalorder %s29, 1
      %p215 = por %p213, %p214
      %p216 = scmp.ne.s32.totalorder %s207, %s208
      %p217 = scmp.eq.s32.totalorder %s29, 0
      %p218 = por %p216, %p217
      %p219 = scmp.ne.s32.totalorder %s207, %s208
      %p220 = scmp.eq.s32.totalorder %s30, 1
      %p221 = por %p219, %p220
      %p223 = scmp.ne.s32.totalorder %s208, %s222
      %p224 = scmp.eq.s32.totalorder %s30, 0
      %p225 = por %p223, %p224
      %s227 = sadd.s32 %s226, 1
      %p230 = scmp.eq.s32.totalorder %s24, 1
      %p231 = scmp.ne.s32.totalorder %s226, %s228
      %p232 = scmp.eq.s32.totalorder %s24, 0
      %p233 = por %p231, %p232
      %p234 = scmp.ne.s32.totalorder %s226, %s228
      %p235 = scmp.eq.s32.totalorder %s29, 1
      %p236 = por %p234, %p235
      %p237 = scmp.ne.s32.totalorder %s228, %s229
      %p238 = scmp.eq.s32.totalorder %s29, 0
      %p239 = por %p237, %p238
      %p240 = scmp.ne.s32.totalorder %s228, %s229
      %p241 = scmp.eq.s32.totalorder %s30, 1
      %p242 = por %p240, %p241
      %p244 = scmp.ne.s32.totalorder %s229, %s243
      %p245 = scmp.eq.s32.totalorder %s30, 0
      %p246 = por %p244, %p245
      %s248 = sadd.s32 %s247, 1
      %p251 = scmp.eq.s32.totalorder %s24, 1
      %p252 = scmp.ne.s32.totalorder %s247, %s249
      %p253 = scmp.eq.s32.totalorder %s24, 0
      %p254 = por %p252, %p253
      %p255 = scmp.ne.s32.totalorder %s247, %s249
      %p256 = scmp.eq.s32.totalorder %s29, 1
      %p257 = por %p255, %p256
      %p258 = scmp.ne.s32.totalorder %s249, %s250
      %p259 = scmp.eq.s32.totalorder %s29, 0
      %p260 = por %p258, %p259
      %p261 = scmp.ne.s32.totalorder %s249, %s250
      %p262 = scmp.eq.s32.totalorder %s30, 1
      %p263 = por %p261, %p262
      %p265 = scmp.ne.s32.totalorder %s250, %s264
      %p266 = scmp.eq.s32.totalorder %s30, 0
      %p267 = por %p265, %p266
      %s269 = sadd.s32 %s268, 1
      %p272 = scmp.eq.s32.totalorder %s24, 1
      %p273 = scmp.ne.s32.totalorder %s268, %s270
      %p274 = scmp.eq.s32.totalorder %s24, 0
      %p275 = por %p273, %p274
      %p276 = scmp.ne.s32.totalorder %s268, %s270
      %p277 = scmp.eq.s32.totalorder %s29, 1
      %p278 = por %p276, %p277
      %p279 = scmp.ne.s32.totalorder %s270, %s271
      %p280 = scmp.eq.s32.totalorder %s29, 0
      %p281 = por %p279, %p280
      %p282 = scmp.ne.s32.totalorder %s270, %s271
      %p283 = scmp.eq.s32.totalorder %s30, 1
      %p284 = por %p282, %p283
      %p286 = scmp.ne.s32.totalorder %s271, %s285
      %p287 = scmp.eq.s32.totalorder %s30, 0
      %p288 = por %p286, %p287
      %s289 = ssub.s32 %s24, %s31
      %p290 = scmp.eq.s32.totalorder %s289, 0
      %s292 = sadd.s32 %s291, 1
      %s293 = scalar_select %p290, %s291, %s292
      %p296 = pneg %p290
      %p297 = scmp.eq.s32.totalorder %s24, 1
      %p298 = por %p296, %p297
      %p299 = scmp.ne.s32.totalorder %s291, %s294
      %p300 = scmp.eq.s32.totalorder %s24, 0
      %p301 = por %p299, %p300
      %p302 = scmp.ne.s32.totalorder %s291, %s294
      %p303 = scmp.eq.s32.totalorder %s29, 1
      %p304 = por %p302, %p303
      %p305 = scmp.ne.s32.totalorder %s294, %s295
      %p306 = scmp.eq.s32.totalorder %s29, 0
      %p307 = por %p305, %p306
      %p308 = scmp.ne.s32.totalorder %s294, %s295
      %p309 = scmp.eq.s32.totalorder %s30, 1
      %p310 = por %p308, %p309
      %p312 = scmp.ne.s32.totalorder %s295, %s311
      %p313 = scmp.eq.s32.totalorder %s30, 0
      %p314 = por %p312, %p313
      %p315 = scmp.le.s32.totalorder 1, %s24
      %p316 = scmp.lt.s32.totalorder %s24, 3
      %p317 = pnand %p315, %p316
      %p318 = pneg %p317
      // Predicated region
      $region9: #{simple_cnn_forward.1} parent=5 // pred_check
        _
      $region10: #{simple_cnn_forward.1} parent=5 // pred_check_branch
        %320 = sbr.rel (%p317) target = $region12
      $region11: #{simple_cnn_forward.1} parent=5 // pred_region
        %s321 = ssub.s32 %s24, 1
        // Predicated region
        $region13: #{simple_cnn_forward.1} parent=11 // pred_check
          %p322 = pneg %p71
        $region14: #{simple_cnn_forward.1} parent=11 // pred_check_branch
          %324 = sbr.rel (%p322) target = $region16
        $region15: #{simple_cnn_forward.1} parent=11 // pred_region
          %s326 = ssub.s32 1536, 1536
          %327 = vsyncadd [#allocation6], %s326
          %s328 = sshll.u32 [#allocation5], 4
          %s329 = int_to_ptr.vmem [resolvable:$true] %s328
          %334 = dma.hbm_to_vmem [thread:$0]  %s1, 1536, %s329, [#allocation6], 128, 128, 8
        $region16: #{simple_cnn_forward.1} parent=11 // pred_fallthru
          _
        // Predicated region
        $region17: #{simple_cnn_forward.1} parent=11 // pred_check
          %p335 = pneg %p92
        $region18: #{simple_cnn_forward.1} parent=11 // pred_check_branch
          %337 = sbr.rel (%p335) target = $region20
        $region19: #{simple_cnn_forward.1} parent=11 // pred_region
          %s339 = ssub.s32 16, 16
          %340 = vsyncadd [#allocation9], %s339
          %s342 = sshll.u32 [#allocation8], 4
          %s343 = int_to_ptr.vmem [resolvable:$true] %s342
          %345 = dma.hbm_to_vmem [thread:$0]  %s2, 16, %s343, [#allocation9]
        $region20: #{simple_cnn_forward.1} parent=11 // pred_fallthru
          _
        // Predicated region
        $region21: #{simple_cnn_forward.1} parent=11 // pred_check
          %p346 = pneg %p113
        $region22: #{simple_cnn_forward.1} parent=11 // pred_check_branch
          %348 = sbr.rel (%p346) target = $region24
        $region23: #{simple_cnn_forward.1} parent=11 // pred_region
          _
        $region24: #{simple_cnn_forward.1} parent=11 // pred_fallthru
          _
        // Predicated region
        $region25: #{simple_cnn_forward.1} parent=11 // pred_check
          %p349 = pneg %p134
        $region26: #{simple_cnn_forward.1} parent=11 // pred_check_branch
          %351 = sbr.rel (%p349) target = $region28
        $region27: #{simple_cnn_forward.1} parent=11 // pred_region
          _
        $region28: #{simple_cnn_forward.1} parent=11 // pred_fallthru
          _
        // Predicated region
        $region29: #{simple_cnn_forward.1} parent=11 // pred_check
          %p352 = pneg %p155
        $region30: #{simple_cnn_forward.1} parent=11 // pred_check_branch
          %354 = sbr.rel (%p352) target = $region32
        $region31: #{simple_cnn_forward.1} parent=11 // pred_region
          %s356 = ssub.s32 16, 16
          %357 = vsyncadd [#allocation9], %s356
          %s359 = sshll.u32 [#allocation10], 4
          %s360 = int_to_ptr.vmem [resolvable:$true] %s359
          %362 = dma.hbm_to_vmem [thread:$0]  %s5, 16, %s360, [#allocation9]
        $region32: #{simple_cnn_forward.1} parent=11 // pred_fallthru
          _
        // Predicated region
        $region33: #{simple_cnn_forward.1} parent=11 // pred_check
          %p363 = pneg %p176
        $region34: #{simple_cnn_forward.1} parent=11 // pred_check_branch
          %365 = sbr.rel (%p363) target = $region36
        $region35: #{simple_cnn_forward.1} parent=11 // pred_region
          _
        $region36: #{simple_cnn_forward.1} parent=11 // pred_fallthru
          _
        // Predicated region
        $region37: #{simple_cnn_forward.1} parent=11 // pred_check
          %p366 = pneg %p197
        $region38: #{simple_cnn_forward.1} parent=11 // pred_check_branch
          %368 = sbr.rel (%p366) target = $region40
        $region39: #{simple_cnn_forward.1} parent=11 // pred_region
          _
        $region40: #{simple_cnn_forward.1} parent=11 // pred_fallthru
          _
        // Predicated region
        $region41: #{simple_cnn_forward.1} parent=11 // pred_check
          %p369 = pneg %p218
        $region42: #{simple_cnn_forward.1} parent=11 // pred_check_branch
          %371 = sbr.rel (%p369) target = $region44
        $region43: #{simple_cnn_forward.1} parent=11 // pred_region
          %s373 = ssub.s32 16, 16
          %374 = vsyncadd [#allocation12], %s373
          %s376 = sshll.u32 [#allocation11], 4
          %s377 = int_to_ptr.vmem [resolvable:$true] %s376
          %379 = dma.hbm_to_vmem [thread:$0]  %s8, 16, %s377, [#allocation12]
        $region44: #{simple_cnn_forward.1} parent=11 // pred_fallthru
          _
        // Predicated region
        $region45: #{simple_cnn_forward.1} parent=11 // pred_check
          %p380 = pneg %p239
        $region46: #{simple_cnn_forward.1} parent=11 // pred_check_branch
          %382 = sbr.rel (%p380) target = $region48
        $region47: #{simple_cnn_forward.1} parent=11 // pred_region
          _
        $region48: #{simple_cnn_forward.1} parent=11 // pred_fallthru
          _
        // Predicated region
        $region49: #{simple_cnn_forward.1} parent=11 // pred_check
          %p383 = pneg %p260
        $region50: #{simple_cnn_forward.1} parent=11 // pred_check_branch
          %385 = sbr.rel (%p383) target = $region52
        $region51: #{simple_cnn_forward.1} parent=11 // pred_region
          _
        $region52: #{simple_cnn_forward.1} parent=11 // pred_fallthru
          _
        // Predicated region
        $region53: #{simple_cnn_forward.1} parent=11 // pred_check
          %p386 = pneg %p281
        $region54: #{simple_cnn_forward.1} parent=11 // pred_check_branch
          %388 = sbr.rel (%p386) target = $region56
        $region55: #{simple_cnn_forward.1} parent=11 // pred_region
          %s390 = ssub.s32 16, 16
          %391 = vsyncadd [#allocation12], %s390
          %s393 = sshll.u32 [#allocation13], 4
          %s394 = int_to_ptr.vmem [resolvable:$true] %s393
          %396 = dma.hbm_to_vmem [thread:$0]  %s11, 16, %s394, [#allocation12]
        $region56: #{simple_cnn_forward.1} parent=11 // pred_fallthru
          _
      $region12: #{simple_cnn_forward.1} parent=5 // pred_fallthru
        _
      %p397 = scmp.lt.s32.totalorder %s24, 2
      // Predicated region
      $region57: #{simple_cnn_forward.1} parent=5 // pred_check
        %p398 = pneg %p397
      $region58: #{simple_cnn_forward.1} parent=5 // pred_check_branch
        %400 = sbr.rel (%p398) target = $region60
      $region59: #{simple_cnn_forward.1} parent=5 // pred_region
        // Predicated region
        $region61: #{simple_cnn_forward.1} parent=59 // pred_check
          %p401 = pneg %p44
        $region62: #{simple_cnn_forward.1} parent=59 // pred_check_branch
          %403 = sbr.rel (%p401) target = $region64
        $region63: #{simple_cnn_forward.1} parent=59 // pred_region
          %p404 = scmp.lt.s32.totalorder %s24, 1
          %s405 = scalar_select %p404, %s24, 1
          %s406 = smul.addr %s405, 4
          %s407 = smul.addr %s406, 8
          %s408 = scalar_lea.vmem %s0, %s407
        $region64: #{simple_cnn_forward.1} parent=59 // pred_fallthru
          _
      $region60: #{simple_cnn_forward.1} parent=5 // pred_fallthru
        _
      %p409 = scmp.le.s32.totalorder 1, %s24
      %p410 = scmp.lt.s32.totalorder %s24, 3
      %p411 = pnand %p409, %p410
      %p412 = pneg %p411
      // Predicated region
      $region65: #{simple_cnn_forward.1} parent=5 // pred_check
        _
      $region66: #{simple_cnn_forward.1} parent=5 // pred_check_branch
        %414 = sbr.rel (%p411) target = $region68
      $region67: #{simple_cnn_forward.1} parent=5 // pred_region
        %s415 = ssub.s32 %s24, 1
        // Predicated region
        $region69: #{simple_cnn_forward.1} parent=67 // pred_check
          %p416 = pneg %p71
        $region70: #{simple_cnn_forward.1} parent=67 // pred_check_branch
          %418 = sbr.rel (%p416) target = $region72
        $region71: #{simple_cnn_forward.1} parent=67 // pred_region
          %419 = dma.done [#allocation6], 1536
        $region72: #{simple_cnn_forward.1} parent=67 // pred_fallthru
          _
        // Predicated region
        $region73: #{simple_cnn_forward.1} parent=67 // pred_check
          %p420 = pneg %p92
        $region74: #{simple_cnn_forward.1} parent=67 // pred_check_branch
          %422 = sbr.rel (%p420) target = $region76
        $region75: #{simple_cnn_forward.1} parent=67 // pred_region
          %423 = dma.done [#allocation9], 16
        $region76: #{simple_cnn_forward.1} parent=67 // pred_fallthru
          _
        // Predicated region
        $region77: #{simple_cnn_forward.1} parent=67 // pred_check
          %p424 = pneg %p155
        $region78: #{simple_cnn_forward.1} parent=67 // pred_check_branch
          %426 = sbr.rel (%p424) target = $region80
        $region79: #{simple_cnn_forward.1} parent=67 // pred_region
          %427 = dma.done [#allocation9], 16
        $region80: #{simple_cnn_forward.1} parent=67 // pred_fallthru
          _
        // Predicated region
        $region81: #{simple_cnn_forward.1} parent=67 // pred_check
          %p428 = pneg %p218
        $region82: #{simple_cnn_forward.1} parent=67 // pred_check_branch
          %430 = sbr.rel (%p428) target = $region84
        $region83: #{simple_cnn_forward.1} parent=67 // pred_region
          %431 = dma.done [#allocation12], 16
        $region84: #{simple_cnn_forward.1} parent=67 // pred_fallthru
          _
        // Predicated region
        $region85: #{simple_cnn_forward.1} parent=67 // pred_check
          %p432 = pneg %p281
        $region86: #{simple_cnn_forward.1} parent=67 // pred_check_branch
          %434 = sbr.rel (%p432) target = $region88
        $region87: #{simple_cnn_forward.1} parent=67 // pred_region
          %435 = dma.done [#allocation12], 16
        $region88: #{simple_cnn_forward.1} parent=67 // pred_fallthru
          _
        %p436 = scmp.lt.s32.totalorder %s29, 1
        %s437 = scalar_select %p436, %s29, 1
        %s438 = smul.addr %s437, 4
        %s439 = smul.addr %s438, 8
        %s440 = scalar_lea.vmem %s0, %s439
        %p441 = pneg %p50
        %p442 = pneg %p47
        %p443 = pneg %p71
        %p444 = pneg %p68
        %p445 = pneg %p92
        %p446 = pneg %p89
        %p447 = pneg %p113
        %p448 = pneg %p110
        %p449 = pneg %p134
        %p450 = pneg %p131
        %p451 = pneg %p155
        %p452 = pneg %p152
        %p453 = pneg %p176
        %p454 = pneg %p173
        %p455 = pneg %p197
        %p456 = pneg %p194
        %p457 = pneg %p218
        %p458 = pneg %p215
        %p459 = pneg %p239
        %p460 = pneg %p236
        %p461 = pneg %p260
        %p462 = pneg %p257
        %p463 = pneg %p281
        %p464 = pneg %p278
        %p465 = pneg %p307
        %p466 = pneg %p304
        %s467 = sand.u32 %s294, 1
        %s468 = scalar_lea.sflag [#allocation7], %s467
        %s469 = sand.u32 %s294, 1
        %s470 = scalar_lea.vmem [#allocation14], %s469
        %p471 = scmp.lt.s32.totalorder %s29, 1
        %s472 = scalar_select %p471, %s29, 1
        %s473 = smul.addr %s472, 4
        %s474 = smul.addr %s473, 8
        %s475 = scalar_lea.vmem %s0, %s474
        %vm476 = vcmask 228352
        %477 = vst.msk [vmem:[#allocation2] sm:$0xff] %vm476, 0.0
        %478 = vst.msk [vmem:[#allocation2 + $0x8] sm:$0xff] %vm476, 0.0
        %479 = vst.msk [vmem:[#allocation2 + $0x10] sm:$0xff] %vm476, 0.0
        %vm480 = vcmask 226304
        %481 = vst.msk [vmem:[#allocation2 + $0x18] sm:$0x3f] %vm480, 0.0
        %v482 = vld [vmem:[%s475] sm:$0xff]
        %v483 = vld [vmem:[%s475 + $0x8] sm:$0xff]
        %v484 = vld [vmem:[%s475 + $0x10] sm:$0xff]
        %v485 = vld [vmem:[%s475 + $0x18] sm:$0xf]
        %486 = vst.msk [vmem:[#allocation2 + $0x1] sm:$0xff] %vm476, %v482
        %487 = vst.msk [vmem:[#allocation2 + $0x9] sm:$0xff] %vm476, %v483
        %488 = vst.msk [vmem:[#allocation2 + $0x11] sm:$0xff] %vm476, %v484
        %vm489 = vcmask 224256
        %490 = vst.msk [vmem:[#allocation2 + $0x19] sm:$0xf] %vm489, %v485
        %v491 = vld [vmem:[#allocation2] sm:$0xff]
        %v492 = vld [vmem:[#allocation2 + $0x8] sm:$0xff]
        %v493 = vld [vmem:[#allocation2 + $0x10] sm:$0xff]
        %v494 = vld [vmem:[#allocation2 + $0x18] sm:$0xf]
        %v495 = vld [vmem:[#allocation5] sm:$0xff]
        %v496 = vld [vmem:[#allocation5 + $0x8] sm:$0xff]
        %v497 = vld [vmem:[#allocation5 + $0x10] sm:$0xff]
        %v498 = vld [vmem:[#allocation5 + $0x18] sm:$0xf]
        %v499 = vld [vmem:[#allocation2 + $0x1] sm:$0xff]
        %v500 = vld [vmem:[#allocation2 + $0x9] sm:$0xff]
        %v501 = vld [vmem:[#allocation2 + $0x11] sm:$0xff]
        %v502 = vld [vmem:[#allocation2 + $0x19] sm:$0xf]
        %s503 = scalar_lea.vmem [#allocation5], 32
        %v504 = vld [vmem:[%s503] sm:$0xff]
        %v505 = vld [vmem:[%s503 + $0x8] sm:$0xff]
        %v506 = vld [vmem:[%s503 + $0x10] sm:$0xff]
        %v507 = vld [vmem:[%s503 + $0x18] sm:$0xf]
        %v509 = vsel %vm476, %v499, 0
        %v512 = vsel %vm476, %v500, 0
        %v515 = vsel %vm476, %v501, 0
        %v518 = vsel %vm476, %v502, 0
        %vm520 = vcmask 1043456
        %v522 = vsel %vm520, %v507, 0
        %524 = vmatprep.subr.mxu0 0.0
        %525 = vmatpush1.msra.mxu0 0.0
        %526 = vmatprep.subr.mxu0 0.0
        %527 = vmatpush1.msra.mxu0 0.0
        %528 = vmatprep.subr.mxu0 0.0
        %529 = vmatpush1.msra.mxu0 0.0
        %530 = vmatprep.subr.mxu0 0.0
        %531 = vmatpush1.msra.mxu0 0.0
        %532 = vmatprep.subr.mxu0 0.0
        %533 = vmatpush1.msra.mxu0 0.0
        %534 = vmatprep.subr.mxu0 0.0
        %535 = vmatpush1.msra.mxu0 0.0
        %536 = vmatprep.subr.mxu0 0.0
        %537 = vmatpush1.msra.mxu0 0.0
        %538 = vmatprep.subr.mxu0 0.0
        %539 = vmatpush1.msra.mxu0 0.0
        %540 = vmatprep.subr.mxu0 0.0
        %541 = vmatpush1.msra.mxu0 0.0
        %542 = vmatprep.subr.mxu0 0.0
        %543 = vmatpush1.msra.mxu0 0.0
        %544 = vmatprep.subr.mxu0 0.0
        %545 = vmatpush1.msra.mxu0 0.0
        %546 = vmatprep.subr.mxu0 0.0
        %547 = vmatpush1.msra.mxu0 0.0
        %548 = vmatprep.subr.mxu0 0.0
        %549 = vmatpush1.msra.mxu0 %v522
        %550 = vmatprep.subr.mxu0 0.0
        %551 = vmatpush1.msra.mxu0 %v506
        %552 = vmatprep.subr.mxu0 0.0
        %553 = vmatpush1.msra.mxu0 %v505
        %554 = vmatprep.subr.mxu0 0.0
        %555 = vmatpush1.msra.mxu0 %v504
        %556 = vmatprep.subr.mxu0 0.0
        %557 = vmatpush2.msra.mxu0 0.0
        %558 = vmatprep.subr.mxu0 0.0
        %559 = vmatpush2.msra.mxu0 0.0
        %560 = vmatprep.subr.mxu0 0.0
        %561 = vmatpush2.msra.mxu0 0.0
        %562 = vmatprep.subr.mxu0 0.0
        %563 = vmatpush2.msra.mxu0 0.0
        %564 = vmatprep.subr.mxu0 0.0
        %565 = vmatpush2.msra.mxu0 0.0
        %566 = vmatprep.subr.mxu0 0.0
        %567 = vmatpush2.msra.mxu0 0.0
        %568 = vmatprep.subr.mxu0 0.0
        %569 = vmatpush2.msra.mxu0 0.0
        %570 = vmatprep.subr.mxu0 0.0
        %571 = vmatpush2.msra.mxu0 0.0
        %572 = vmatprep.subr.mxu0 0.0
        %573 = vmatpush2.msra.mxu0 0.0
        %574 = vmatprep.subr.mxu0 0.0
        %575 = vmatpush2.msra.mxu0 0.0
        %576 = vmatprep.subr.mxu0 0.0
        %577 = vmatpush2.msra.mxu0 0.0
        %578 = vmatprep.subr.mxu0 0.0
        %579 = vmatpush2.msra.mxu0 0.0
        %580 = vmatprep.subr.mxu0 0.0
        %581 = vmatpush2.msra.mxu0 0.0
        %582 = vmatprep.subr.mxu0 0.0
        %583 = vmatpush2.msra.mxu0 0.0
        %584 = vmatprep.subr.mxu0 0.0
        %585 = vmatpush2.msra.mxu0 0.0
        %586 = vmatprep.subr.mxu0 0.0
        %587 = vmatpush2.msra.mxu0 0.0
        %588 = vmatprep.mubr.f32.mxu0 0.0
        %589 = vmatmul.mubr.f32.gmra.mxu0 %v509
        %v590 = vpop.f32.mrf.mxu0
        %v591 = vadd.f32 0.0, %v590
        %v592 = vpop.f32.mrf.mxu0
        %593 = vmatprep.mubr.f32.mxu0 0.0
        %594 = vmatmul.mubr.f32.gmra.mxu0 %v512
        %v595 = vpop.f32.mrf.mxu0
        %v596 = vadd.f32 0.0, %v595
        %v597 = vpop.f32.mrf.mxu0
        %598 = vmatprep.mubr.f32.mxu0 0.0
        %599 = vmatmul.mubr.f32.gmra.mxu0 %v515
        %v600 = vpop.f32.mrf.mxu0
        %v601 = vadd.f32 0.0, %v600
        %v602 = vpop.f32.mrf.mxu0
        %603 = vmatprep.mubr.f32.mxu0 0.0
        %604 = vmatmul.mubr.f32.gmra.mxu0 %v518
        %v605 = vpop.f32.mrf.mxu0
        %v606 = vadd.f32 0.0, %v605
        %v607 = vpop.f32.mrf.mxu0
        %608 = vdwg.mxu0
        %v610 = vsel %vm476, %v491, 0
        %v613 = vsel %vm476, %v492, 0
        %v616 = vsel %vm476, %v493, 0
        %v619 = vsel %vm476, %v494, 0
        %v622 = vsel %vm520, %v498, 0
        %624 = vmatprep.subr.mxu0 0.0
        %625 = vmatpush1.msra.mxu0 0.0
        %626 = vmatprep.subr.mxu0 0.0
        %627 = vmatpush1.msra.mxu0 0.0
        %628 = vmatprep.subr.mxu0 0.0
        %629 = vmatpush1.msra.mxu0 0.0
        %630 = vmatprep.subr.mxu0 0.0
        %631 = vmatpush1.msra.mxu0 0.0
        %632 = vmatprep.subr.mxu0 0.0
        %633 = vmatpush1.msra.mxu0 0.0
        %634 = vmatprep.subr.mxu0 0.0
        %635 = vmatpush1.msra.mxu0 0.0
        %636 = vmatprep.subr.mxu0 0.0
        %637 = vmatpush1.msra.mxu0 0.0
        %638 = vmatprep.subr.mxu0 0.0
        %639 = vmatpush1.msra.mxu0 0.0
        %640 = vmatprep.subr.mxu0 0.0
        %641 = vmatpush1.msra.mxu0 0.0
        %642 = vmatprep.subr.mxu0 0.0
        %643 = vmatpush1.msra.mxu0 0.0
        %644 = vmatprep.subr.mxu0 0.0
        %645 = vmatpush1.msra.mxu0 0.0
        %646 = vmatprep.subr.mxu0 0.0
        %647 = vmatpush1.msra.mxu0 0.0
        %648 = vmatprep.subr.mxu0 0.0
        %649 = vmatpush1.msra.mxu0 %v622
        %650 = vmatprep.subr.mxu0 0.0
        %651 = vmatpush1.msra.mxu0 %v497
        %652 = vmatprep.subr.mxu0 0.0
        %653 = vmatpush1.msra.mxu0 %v496
        %654 = vmatprep.subr.mxu0 0.0
        %655 = vmatpush1.msra.mxu0 %v495
        %656 = vmatprep.subr.mxu0 0.0
        %657 = vmatpush2.msra.mxu0 0.0
        %658 = vmatprep.subr.mxu0 0.0
        %659 = vmatpush2.msra.mxu0 0.0
        %660 = vmatprep.subr.mxu0 0.0
        %661 = vmatpush2.msra.mxu0 0.0
        %662 = vmatprep.subr.mxu0 0.0
        %663 = vmatpush2.msra.mxu0 0.0
        %664 = vmatprep.subr.mxu0 0.0
        %665 = vmatpush2.msra.mxu0 0.0
        %666 = vmatprep.subr.mxu0 0.0
        %667 = vmatpush2.msra.mxu0 0.0
        %668 = vmatprep.subr.mxu0 0.0
        %669 = vmatpush2.msra.mxu0 0.0
        %670 = vmatprep.subr.mxu0 0.0
        %671 = vmatpush2.msra.mxu0 0.0
        %672 = vmatprep.subr.mxu0 0.0
        %673 = vmatpush2.msra.mxu0 0.0
        %674 = vmatprep.subr.mxu0 0.0
        %675 = vmatpush2.msra.mxu0 0.0
        %676 = vmatprep.subr.mxu0 0.0
        %677 = vmatpush2.msra.mxu0 0.0
        %678 = vmatprep.subr.mxu0 0.0
        %679 = vmatpush2.msra.mxu0 0.0
        %680 = vmatprep.subr.mxu0 0.0
        %681 = vmatpush2.msra.mxu0 0.0
        %682 = vmatprep.subr.mxu0 0.0
        %683 = vmatpush2.msra.mxu0 0.0
        %684 = vmatprep.subr.mxu0 0.0
        %685 = vmatpush2.msra.mxu0 0.0
        %686 = vmatprep.subr.mxu0 0.0
        %687 = vmatpush2.msra.mxu0 0.0
        %688 = vmatprep.mubr.f32.mxu0 0.0
        %689 = vmatmul.mubr.f32.gmra.mxu0 %v610
        %v690 = vpop.f32.mrf.mxu0
        %v691 = vadd.f32 %v591, %v690
        %v692 = vpop.f32.mrf.mxu0
        %693 = vmatprep.mubr.f32.mxu0 0.0
        %694 = vmatmul.mubr.f32.gmra.mxu0 %v613
        %v695 = vpop.f32.mrf.mxu0
        %v696 = vadd.f32 %v596, %v695
        %v697 = vpop.f32.mrf.mxu0
        %698 = vmatprep.mubr.f32.mxu0 0.0
        %699 = vmatmul.mubr.f32.gmra.mxu0 %v616
        %v700 = vpop.f32.mrf.mxu0
        %v701 = vadd.f32 %v601, %v700
        %v702 = vpop.f32.mrf.mxu0
        %703 = vmatprep.mubr.f32.mxu0 0.0
        %704 = vmatmul.mubr.f32.gmra.mxu0 %v619
        %v705 = vpop.f32.mrf.mxu0
        %v706 = vadd.f32 %v606, %v705
        %v707 = vpop.f32.mrf.mxu0
        %708 = vdwg.mxu0
        %v709 = vld [vmem:[#allocation2 + $0x2] sm:$0xff]
        %v710 = vld [vmem:[#allocation2 + $0xa] sm:$0xff]
        %v711 = vld [vmem:[#allocation2 + $0x12] sm:$0xff]
        %v712 = vld [vmem:[#allocation2 + $0x1a] sm:$0xf]
        %s713 = scalar_lea.vmem [#allocation5], 64
        %v714 = vld [vmem:[%s713] sm:$0xff]
        %v715 = vld [vmem:[%s713 + $0x8] sm:$0xff]
        %v716 = vld [vmem:[%s713 + $0x10] sm:$0xff]
        %v717 = vld [vmem:[%s713 + $0x18] sm:$0xf]
        %v719 = vsel %vm476, %v709, 0
        %v722 = vsel %vm476, %v710, 0
        %v725 = vsel %vm476, %v711, 0
        %v728 = vsel %vm476, %v712, 0
        %v731 = vsel %vm520, %v717, 0
        %733 = vmatprep.subr.mxu0 0.0
        %734 = vmatpush1.msra.mxu0 0.0
        %735 = vmatprep.subr.mxu0 0.0
        %736 = vmatpush1.msra.mxu0 0.0
        %737 = vmatprep.subr.mxu0 0.0
        %738 = vmatpush1.msra.mxu0 0.0
        %739 = vmatprep.subr.mxu0 0.0
        %740 = vmatpush1.msra.mxu0 0.0
        %741 = vmatprep.subr.mxu0 0.0
        %742 = vmatpush1.msra.mxu0 0.0
        %743 = vmatprep.subr.mxu0 0.0
        %744 = vmatpush1.msra.mxu0 0.0
        %745 = vmatprep.subr.mxu0 0.0
        %746 = vmatpush1.msra.mxu0 0.0
        %747 = vmatprep.subr.mxu0 0.0
        %748 = vmatpush1.msra.mxu0 0.0
        %749 = vmatprep.subr.mxu0 0.0
        %750 = vmatpush1.msra.mxu0 0.0
        %751 = vmatprep.subr.mxu0 0.0
        %752 = vmatpush1.msra.mxu0 0.0
        %753 = vmatprep.subr.mxu0 0.0
        %754 = vmatpush1.msra.mxu0 0.0
        %755 = vmatprep.subr.mxu0 0.0
        %756 = vmatpush1.msra.mxu0 0.0
        %757 = vmatprep.subr.mxu0 0.0
        %758 = vmatpush1.msra.mxu0 %v731
        %759 = vmatprep.subr.mxu0 0.0
        %760 = vmatpush1.msra.mxu0 %v716
        %761 = vmatprep.subr.mxu0 0.0
        %762 = vmatpush1.msra.mxu0 %v715
        %763 = vmatprep.subr.mxu0 0.0
        %764 = vmatpush1.msra.mxu0 %v714
        %765 = vmatprep.subr.mxu0 0.0
        %766 = vmatpush2.msra.mxu0 0.0
        %767 = vmatprep.subr.mxu0 0.0
        %768 = vmatpush2.msra.mxu0 0.0
        %769 = vmatprep.subr.mxu0 0.0
        %770 = vmatpush2.msra.mxu0 0.0
        %771 = vmatprep.subr.mxu0 0.0
        %772 = vmatpush2.msra.mxu0 0.0
        %773 = vmatprep.subr.mxu0 0.0
        %774 = vmatpush2.msra.mxu0 0.0
        %775 = vmatprep.subr.mxu0 0.0
        %776 = vmatpush2.msra.mxu0 0.0
        %777 = vmatprep.subr.mxu0 0.0
        %778 = vmatpush2.msra.mxu0 0.0
        %779 = vmatprep.subr.mxu0 0.0
        %780 = vmatpush2.msra.mxu0 0.0
        %781 = vmatprep.subr.mxu0 0.0
        %782 = vmatpush2.msra.mxu0 0.0
        %783 = vmatprep.subr.mxu0 0.0
        %784 = vmatpush2.msra.mxu0 0.0
        %785 = vmatprep.subr.mxu0 0.0
        %786 = vmatpush2.msra.mxu0 0.0
        %787 = vmatprep.subr.mxu0 0.0
        %788 = vmatpush2.msra.mxu0 0.0
        %789 = vmatprep.subr.mxu0 0.0
        %790 = vmatpush2.msra.mxu0 0.0
        %791 = vmatprep.subr.mxu0 0.0
        %792 = vmatpush2.msra.mxu0 0.0
        %793 = vmatprep.subr.mxu0 0.0
        %794 = vmatpush2.msra.mxu0 0.0
        %795 = vmatprep.subr.mxu0 0.0
        %796 = vmatpush2.msra.mxu0 0.0
        %797 = vmatprep.mubr.f32.mxu0 0.0
        %798 = vmatmul.mubr.f32.gmra.mxu0 %v719
        %v799 = vpop.f32.mrf.mxu0
        %v800 = vadd.f32 0.0, %v799
        %v801 = vpop.f32.mrf.mxu0
        %802 = vmatprep.mubr.f32.mxu0 0.0
        %803 = vmatmul.mubr.f32.gmra.mxu0 %v722
        %v804 = vpop.f32.mrf.mxu0
        %v805 = vadd.f32 0.0, %v804
        %v806 = vpop.f32.mrf.mxu0
        %807 = vmatprep.mubr.f32.mxu0 0.0
        %808 = vmatmul.mubr.f32.gmra.mxu0 %v725
        %v809 = vpop.f32.mrf.mxu0
        %v810 = vadd.f32 0.0, %v809
        %v811 = vpop.f32.mrf.mxu0
        %812 = vmatprep.mubr.f32.mxu0 0.0
        %813 = vmatmul.mubr.f32.gmra.mxu0 %v728
        %v814 = vpop.f32.mrf.mxu0
        %v815 = vadd.f32 0.0, %v814
        %v816 = vpop.f32.mrf.mxu0
        %817 = vdwg.mxu0
        %v818 = vadd.f32 %v691, %v800
        %v819 = vadd.f32 %v696, %v805
        %v820 = vadd.f32 %v701, %v810
        %v821 = vadd.f32 %v706, %v815
        %v822 = vld [vmem:[#allocation8] sm:$0x1]
        %v824 = vlaneseq
        %v825 = vshrl.u32 %v824, 7
        %v826 = vsub.s32 0, %v825
        %v827 = vrot.slane %v822, %v826
        %v829 = vadd.f32 %v818, %v827
        %v830 = vadd.f32 %v819, %v827
        %v831 = vadd.f32 %v820, %v827
        %v832 = vadd.f32 %v821, %v827
        %v833 = vld [vmem:[%s3] sm:$0xff]
        %v834 = vld [vmem:[%s3 + $0x8] sm:$0x3f]
        %v836 = vsel %vm476, %v833, 0
        %v839 = vsel %vm476, %v834, 0
        %v842 = vsel %vm520, %v832, 0
        %844 = vmatprep.subr.mxu0 0.0
        %845 = vmatpush1.msra.mxu0 0.0
        %846 = vmatprep.subr.mxu0 0.0
        %847 = vmatpush1.msra.mxu0 0.0
        %848 = vmatprep.subr.mxu0 0.0
        %849 = vmatpush1.msra.mxu0 0.0
        %850 = vmatprep.subr.mxu0 0.0
        %851 = vmatpush1.msra.mxu0 0.0
        %852 = vmatprep.subr.mxu0 0.0
        %853 = vmatpush1.msra.mxu0 0.0
        %854 = vmatprep.subr.mxu0 0.0
        %855 = vmatpush1.msra.mxu0 0.0
        %856 = vmatprep.subr.mxu0 0.0
        %857 = vmatpush1.msra.mxu0 0.0
        %858 = vmatprep.subr.mxu0 0.0
        %859 = vmatpush1.msra.mxu0 0.0
        %860 = vmatprep.subr.mxu0 0.0
        %861 = vmatpush1.msra.mxu0 0.0
        %862 = vmatprep.subr.mxu0 0.0
        %863 = vmatpush1.msra.mxu0 0.0
        %864 = vmatprep.subr.mxu0 0.0
        %865 = vmatpush1.msra.mxu0 0.0
        %866 = vmatprep.subr.mxu0 0.0
        %867 = vmatpush1.msra.mxu0 0.0
        %868 = vmatprep.subr.mxu0 0.0
        %869 = vmatpush1.msra.mxu0 %v842
        %870 = vmatprep.subr.mxu0 0.0
        %871 = vmatpush1.msra.mxu0 %v831
        %872 = vmatprep.subr.mxu0 0.0
        %873 = vmatpush1.msra.mxu0 %v830
        %874 = vmatprep.subr.mxu0 0.0
        %875 = vmatpush1.msra.mxu0 %v829
        %876 = vmatprep.subr.mxu0 0.0
        %877 = vmatpush2.msra.mxu0 0.0
        %878 = vmatprep.subr.mxu0 0.0
        %879 = vmatpush2.msra.mxu0 0.0
        %880 = vmatprep.subr.mxu0 0.0
        %881 = vmatpush2.msra.mxu0 0.0
        %882 = vmatprep.subr.mxu0 0.0
        %883 = vmatpush2.msra.mxu0 0.0
        %884 = vmatprep.subr.mxu0 0.0
        %885 = vmatpush2.msra.mxu0 0.0
        %886 = vmatprep.subr.mxu0 0.0
        %887 = vmatpush2.msra.mxu0 0.0
        %888 = vmatprep.subr.mxu0 0.0
        %889 = vmatpush2.msra.mxu0 0.0
        %890 = vmatprep.subr.mxu0 0.0
        %891 = vmatpush2.msra.mxu0 0.0
        %892 = vmatprep.subr.mxu0 0.0
        %893 = vmatpush2.msra.mxu0 0.0
        %894 = vmatprep.subr.mxu0 0.0
        %895 = vmatpush2.msra.mxu0 0.0
        %896 = vmatprep.subr.mxu0 0.0
        %897 = vmatpush2.msra.mxu0 0.0
        %898 = vmatprep.subr.mxu0 0.0
        %899 = vmatpush2.msra.mxu0 0.0
        %900 = vmatprep.subr.mxu0 0.0
        %901 = vmatpush2.msra.mxu0 0.0
        %902 = vmatprep.subr.mxu0 0.0
        %903 = vmatpush2.msra.mxu0 0.0
        %904 = vmatprep.subr.mxu0 0.0
        %905 = vmatpush2.msra.mxu0 0.0
        %906 = vmatprep.subr.mxu0 0.0
        %907 = vmatpush2.msra.mxu0 0.0
        %908 = vmatprep.mubr.f32.mxu0 0.0
        %909 = vmatmul.mubr.f32.gmra.mxu0 %v836
        %v910 = vpop.f32.mrf.mxu0
        %v911 = vadd.f32 0.0, %v910
        %v912 = vpop.f32.mrf.mxu0
        %913 = vmatprep.mubr.f32.mxu0 0.0
        %914 = vmatmul.mubr.f32.gmra.mxu0 %v839
        %v915 = vpop.f32.mrf.mxu0
        %v916 = vadd.f32 0.0, %v915
        %v917 = vpop.f32.mrf.mxu0
        %918 = vdwg.mxu0
        %s919 = scalar_lea.vmem %s3, 16
        %v920 = vld [vmem:[%s919] sm:$0xff]
        %v921 = vld [vmem:[%s919 + $0x8] sm:$0x3f]
        %v923 = vsel %vm476, %v920, 0
        %v926 = vsel %vm476, %v921, 0
        %928 = vmatprep.subr.mxu0 0.0
        %929 = vmatpush1.msra.mxu0 0.0
        %930 = vmatprep.subr.mxu0 0.0
        %931 = vmatpush1.msra.mxu0 0.0
        %932 = vmatprep.subr.mxu0 0.0
        %933 = vmatpush1.msra.mxu0 0.0
        %934 = vmatprep.subr.mxu0 0.0
        %935 = vmatpush1.msra.mxu0 0.0
        %936 = vmatprep.subr.mxu0 0.0
        %937 = vmatpush1.msra.mxu0 0.0
        %938 = vmatprep.subr.mxu0 0.0
        %939 = vmatpush1.msra.mxu0 0.0
        %940 = vmatprep.subr.mxu0 0.0
        %941 = vmatpush1.msra.mxu0 0.0
        %942 = vmatprep.subr.mxu0 0.0
        %943 = vmatpush1.msra.mxu0 0.0
        %944 = vmatprep.subr.mxu0 0.0
        %945 = vmatpush1.msra.mxu0 0.0
        %946 = vmatprep.subr.mxu0 0.0
        %947 = vmatpush1.msra.mxu0 0.0
        %948 = vmatprep.subr.mxu0 0.0
        %949 = vmatpush1.msra.mxu0 0.0
        %950 = vmatprep.subr.mxu0 0.0
        %951 = vmatpush1.msra.mxu0 0.0
        %952 = vmatprep.subr.mxu0 0.0
        %953 = vmatpush1.msra.mxu0 %v842
        %954 = vmatprep.subr.mxu0 0.0
        %955 = vmatpush1.msra.mxu0 %v831
        %956 = vmatprep.subr.mxu0 0.0
        %957 = vmatpush1.msra.mxu0 %v830
        %958 = vmatprep.subr.mxu0 0.0
        %959 = vmatpush1.msra.mxu0 %v829
        %960 = vmatprep.subr.mxu0 0.0
        %961 = vmatpush2.msra.mxu0 0.0
        %962 = vmatprep.subr.mxu0 0.0
        %963 = vmatpush2.msra.mxu0 0.0
        %964 = vmatprep.subr.mxu0 0.0
        %965 = vmatpush2.msra.mxu0 0.0
        %966 = vmatprep.subr.mxu0 0.0
        %967 = vmatpush2.msra.mxu0 0.0
        %968 = vmatprep.subr.mxu0 0.0
        %969 = vmatpush2.msra.mxu0 0.0
        %970 = vmatprep.subr.mxu0 0.0
        %971 = vmatpush2.msra.mxu0 0.0
        %972 = vmatprep.subr.mxu0 0.0
        %973 = vmatpush2.msra.mxu0 0.0
        %974 = vmatprep.subr.mxu0 0.0
        %975 = vmatpush2.msra.mxu0 0.0
        %976 = vmatprep.subr.mxu0 0.0
        %977 = vmatpush2.msra.mxu0 0.0
        %978 = vmatprep.subr.mxu0 0.0
        %979 = vmatpush2.msra.mxu0 0.0
        %980 = vmatprep.subr.mxu0 0.0
        %981 = vmatpush2.msra.mxu0 0.0
        %982 = vmatprep.subr.mxu0 0.0
        %983 = vmatpush2.msra.mxu0 0.0
        %984 = vmatprep.subr.mxu0 0.0
        %985 = vmatpush2.msra.mxu0 0.0
        %986 = vmatprep.subr.mxu0 0.0
        %987 = vmatpush2.msra.mxu0 0.0
        %988 = vmatprep.subr.mxu0 0.0
        %989 = vmatpush2.msra.mxu0 0.0
        %990 = vmatprep.subr.mxu0 0.0
        %991 = vmatpush2.msra.mxu0 0.0
        %992 = vmatprep.mubr.f32.mxu0 0.0
        %993 = vmatmul.mubr.f32.gmra.mxu0 %v923
        %v994 = vpop.f32.mrf.mxu0
        %v995 = vadd.f32 0.0, %v994
        %v996 = vpop.f32.mrf.mxu0
        %997 = vmatprep.mubr.f32.mxu0 0.0
        %998 = vmatmul.mubr.f32.gmra.mxu0 %v926
        %v999 = vpop.f32.mrf.mxu0
        %v1000 = vadd.f32 0.0, %v999
        %v1001 = vpop.f32.mrf.mxu0
        %1002 = vdwg.mxu0
        %v1003 = vmax.f32 %v911, %v995
        %v1004 = vmax.f32 %v916, %v1000
        %1007 = vrot.lane.b32.xlu0 %v1003, 72
        %v1008 = vpop.permute.xlu0 %1007
        %1009 = vrot.lane.b32.xlu0 %v1004, 72
        %v1010 = vpop.permute.xlu0 %1009
        %v1013 = vmax.f32 %v1003, %v1008
        %v1014 = vmax.f32 %v1004, %v1010
        %v1015 = vmax.f32 %v1013, 0.0
        %v1016 = vmax.f32 %v1014, 0.0
        %vm1017 = vcmask 457728
        %1018 = vst.msk [vmem:[#allocation3] sm:$0xff] %vm1017, 0.0
        %1019 = vst.msk [vmem:[#allocation3 + $0x8] sm:$0xff] %vm1017, 0.0
        %1020 = vst.msk [vmem:[#allocation3 + $0x1] sm:$0xff] %vm1017, %v1015
        %vm1021 = vcmask 455680
        %1022 = vst.msk [vmem:[#allocation3 + $0x9] sm:$0x3f] %vm1021, %v1016
        %v1023 = vld [vmem:[#allocation3] sm:$0xff]
        %v1024 = vld [vmem:[#allocation3 + $0x8] sm:$0x3f]
        %v1025 = vld [vmem:[%s4] sm:$0xff]
        %v1026 = vld [vmem:[%s4 + $0x8] sm:$0xff]
        %v1027 = vld [vmem:[%s4 + $0x10] sm:$0xff]
        %v1028 = vld [vmem:[%s4 + $0x18] sm:$0xff]
        %v1029 = vld [vmem:[%s4 + $0x20] sm:$0xff]
        %v1030 = vld [vmem:[%s4 + $0x28] sm:$0xff]
        %v1031 = vld [vmem:[%s4 + $0x30] sm:$0xff]
        %v1032 = vld [vmem:[#allocation3 + $0x1] sm:$0xff]
        %v1033 = vld [vmem:[#allocation3 + $0x9] sm:$0x3f]
        %s1034 = scalar_lea.vmem %s4, 56
        %v1035 = vld [vmem:[%s1034] sm:$0xff]
        %v1036 = vld [vmem:[%s1034 + $0x8] sm:$0xff]
        %v1037 = vld [vmem:[%s1034 + $0x10] sm:$0xff]
        %v1038 = vld [vmem:[%s1034 + $0x18] sm:$0xff]
        %v1039 = vld [vmem:[%s1034 + $0x20] sm:$0xff]
        %v1040 = vld [vmem:[%s1034 + $0x28] sm:$0xff]
        %v1041 = vld [vmem:[%s1034 + $0x30] sm:$0xff]
        %v1043 = vsel %vm1017, %v1032, 0
        %v1046 = vsel %vm1017, %v1033, 0
        %1048 = vmatprep.subr.mxu0 0.0
        %1049 = vmatpush1.msra.mxu0 0.0
        %1050 = vmatprep.subr.mxu0 0.0
        %1051 = vmatpush1.msra.mxu0 0.0
        %1052 = vmatprep.subr.mxu0 0.0
        %1053 = vmatpush1.msra.mxu0 0.0
        %1054 = vmatprep.subr.mxu0 0.0
        %1055 = vmatpush1.msra.mxu0 0.0
        %1056 = vmatprep.subr.mxu0 0.0
        %1057 = vmatpush1.msra.mxu0 0.0
        %1058 = vmatprep.subr.mxu0 0.0
        %1059 = vmatpush1.msra.mxu0 0.0
        %1060 = vmatprep.subr.mxu0 0.0
        %1061 = vmatpush1.msra.mxu0 0.0
        %1062 = vmatprep.subr.mxu0 0.0
        %1063 = vmatpush1.msra.mxu0 0.0
        %1064 = vmatprep.subr.mxu0 0.0
        %1065 = vmatpush1.msra.mxu0 0.0
        %1066 = vmatprep.subr.mxu0 0.0
        %1067 = vmatpush1.msra.mxu0 %v1041
        %1068 = vmatprep.subr.mxu0 0.0
        %1069 = vmatpush1.msra.mxu0 %v1040
        %1070 = vmatprep.subr.mxu0 0.0
        %1071 = vmatpush1.msra.mxu0 %v1039
        %1072 = vmatprep.subr.mxu0 0.0
        %1073 = vmatpush1.msra.mxu0 %v1038
        %1074 = vmatprep.subr.mxu0 0.0
        %1075 = vmatpush1.msra.mxu0 %v1037
        %1076 = vmatprep.subr.mxu0 0.0
        %1077 = vmatpush1.msra.mxu0 %v1036
        %1078 = vmatprep.subr.mxu0 0.0
        %1079 = vmatpush1.msra.mxu0 %v1035
        %1080 = vmatprep.subr.mxu0 0.0
        %1081 = vmatpush2.msra.mxu0 0.0
        %1082 = vmatprep.subr.mxu0 0.0
        %1083 = vmatpush2.msra.mxu0 0.0
        %1084 = vmatprep.subr.mxu0 0.0
        %1085 = vmatpush2.msra.mxu0 0.0
        %1086 = vmatprep.subr.mxu0 0.0
        %1087 = vmatpush2.msra.mxu0 0.0
        %1088 = vmatprep.subr.mxu0 0.0
        %1089 = vmatpush2.msra.mxu0 0.0
        %1090 = vmatprep.subr.mxu0 0.0
        %1091 = vmatpush2.msra.mxu0 0.0
        %1092 = vmatprep.subr.mxu0 0.0
        %1093 = vmatpush2.msra.mxu0 0.0
        %1094 = vmatprep.subr.mxu0 0.0
        %1095 = vmatpush2.msra.mxu0 0.0
        %1096 = vmatprep.subr.mxu0 0.0
        %1097 = vmatpush2.msra.mxu0 0.0
        %1098 = vmatprep.subr.mxu0 0.0
        %1099 = vmatpush2.msra.mxu0 0.0
        %1100 = vmatprep.subr.mxu0 0.0
        %1101 = vmatpush2.msra.mxu0 0.0
        %1102 = vmatprep.subr.mxu0 0.0
        %1103 = vmatpush2.msra.mxu0 0.0
        %1104 = vmatprep.subr.mxu0 0.0
        %1105 = vmatpush2.msra.mxu0 0.0
        %1106 = vmatprep.subr.mxu0 0.0
        %1107 = vmatpush2.msra.mxu0 0.0
        %1108 = vmatprep.subr.mxu0 0.0
        %1109 = vmatpush2.msra.mxu0 0.0
        %1110 = vmatprep.subr.mxu0 0.0
        %1111 = vmatpush2.msra.mxu0 0.0
        %1112 = vmatprep.mubr.f32.mxu0 0.0
        %1113 = vmatmul.mubr.f32.gmra.mxu0 %v1043
        %v1114 = vpop.f32.mrf.mxu0
        %v1115 = vadd.f32 0.0, %v1114
        %v1116 = vpop.f32.mrf.mxu0
        %1117 = vmatprep.mubr.f32.mxu0 0.0
        %1118 = vmatmul.mubr.f32.gmra.mxu0 %v1046
        %v1119 = vpop.f32.mrf.mxu0
        %v1120 = vadd.f32 0.0, %v1119
        %v1121 = vpop.f32.mrf.mxu0
        %1122 = vdwg.mxu0
        %v1124 = vsel %vm1017, %v1023, 0
        %v1127 = vsel %vm1017, %v1024, 0
        %1129 = vmatprep.subr.mxu0 0.0
        %1130 = vmatpush1.msra.mxu0 0.0
        %1131 = vmatprep.subr.mxu0 0.0
        %1132 = vmatpush1.msra.mxu0 0.0
        %1133 = vmatprep.subr.mxu0 0.0
        %1134 = vmatpush1.msra.mxu0 0.0
        %1135 = vmatprep.subr.mxu0 0.0
        %1136 = vmatpush1.msra.mxu0 0.0
        %1137 = vmatprep.subr.mxu0 0.0
        %1138 = vmatpush1.msra.mxu0 0.0
        %1139 = vmatprep.subr.mxu0 0.0
        %1140 = vmatpush1.msra.mxu0 0.0
        %1141 = vmatprep.subr.mxu0 0.0
        %1142 = vmatpush1.msra.mxu0 0.0
        %1143 = vmatprep.subr.mxu0 0.0
        %1144 = vmatpush1.msra.mxu0 0.0
        %1145 = vmatprep.subr.mxu0 0.0
        %1146 = vmatpush1.msra.mxu0 0.0
        %1147 = vmatprep.subr.mxu0 0.0
        %1148 = vmatpush1.msra.mxu0 %v1031
        %1149 = vmatprep.subr.mxu0 0.0
        %1150 = vmatpush1.msra.mxu0 %v1030
        %1151 = vmatprep.subr.mxu0 0.0
        %1152 = vmatpush1.msra.mxu0 %v1029
        %1153 = vmatprep.subr.mxu0 0.0
        %1154 = vmatpush1.msra.mxu0 %v1028
        %1155 = vmatprep.subr.mxu0 0.0
        %1156 = vmatpush1.msra.mxu0 %v1027
        %1157 = vmatprep.subr.mxu0 0.0
        %1158 = vmatpush1.msra.mxu0 %v1026
        %1159 = vmatprep.subr.mxu0 0.0
        %1160 = vmatpush1.msra.mxu0 %v1025
        %1161 = vmatprep.subr.mxu0 0.0
        %1162 = vmatpush2.msra.mxu0 0.0
        %1163 = vmatprep.subr.mxu0 0.0
        %1164 = vmatpush2.msra.mxu0 0.0
        %1165 = vmatprep.subr.mxu0 0.0
        %1166 = vmatpush2.msra.mxu0 0.0
        %1167 = vmatprep.subr.mxu0 0.0
        %1168 = vmatpush2.msra.mxu0 0.0
        %1169 = vmatprep.subr.mxu0 0.0
        %1170 = vmatpush2.msra.mxu0 0.0
        %1171 = vmatprep.subr.mxu0 0.0
        %1172 = vmatpush2.msra.mxu0 0.0
        %1173 = vmatprep.subr.mxu0 0.0
        %1174 = vmatpush2.msra.mxu0 0.0
        %1175 = vmatprep.subr.mxu0 0.0
        %1176 = vmatpush2.msra.mxu0 0.0
        %1177 = vmatprep.subr.mxu0 0.0
        %1178 = vmatpush2.msra.mxu0 0.0
        %1179 = vmatprep.subr.mxu0 0.0
        %1180 = vmatpush2.msra.mxu0 0.0
        %1181 = vmatprep.subr.mxu0 0.0
        %1182 = vmatpush2.msra.mxu0 0.0
        %1183 = vmatprep.subr.mxu0 0.0
        %1184 = vmatpush2.msra.mxu0 0.0
        %1185 = vmatprep.subr.mxu0 0.0
        %1186 = vmatpush2.msra.mxu0 0.0
        %1187 = vmatprep.subr.mxu0 0.0
        %1188 = vmatpush2.msra.mxu0 0.0
        %1189 = vmatprep.subr.mxu0 0.0
        %1190 = vmatpush2.msra.mxu0 0.0
        %1191 = vmatprep.subr.mxu0 0.0
        %1192 = vmatpush2.msra.mxu0 0.0
        %1193 = vmatprep.mubr.f32.mxu0 0.0
        %1194 = vmatmul.mubr.f32.gmra.mxu0 %v1124
        %v1195 = vpop.f32.mrf.mxu0
        %v1196 = vadd.f32 %v1115, %v1195
        %v1197 = vpop.f32.mrf.mxu0
        %1198 = vmatprep.mubr.f32.mxu0 0.0
        %1199 = vmatmul.mubr.f32.gmra.mxu0 %v1127
        %v1200 = vpop.f32.mrf.mxu0
        %v1201 = vadd.f32 %v1120, %v1200
        %v1202 = vpop.f32.mrf.mxu0
        %1203 = vdwg.mxu0
        %v1204 = vld [vmem:[#allocation3 + $0x2] sm:$0xff]
        %v1205 = vld [vmem:[#allocation3 + $0xa] sm:$0x3f]
        %s1206 = scalar_lea.vmem %s4, 112
        %v1207 = vld [vmem:[%s1206] sm:$0xff]
        %v1208 = vld [vmem:[%s1206 + $0x8] sm:$0xff]
        %v1209 = vld [vmem:[%s1206 + $0x10] sm:$0xff]
        %v1210 = vld [vmem:[%s1206 + $0x18] sm:$0xff]
        %v1211 = vld [vmem:[%s1206 + $0x20] sm:$0xff]
        %v1212 = vld [vmem:[%s1206 + $0x28] sm:$0xff]
        %v1213 = vld [vmem:[%s1206 + $0x30] sm:$0xff]
        %v1215 = vsel %vm1017, %v1204, 0
        %v1218 = vsel %vm1017, %v1205, 0
        %1220 = vmatprep.subr.mxu0 0.0
        %1221 = vmatpush1.msra.mxu0 0.0
        %1222 = vmatprep.subr.mxu0 0.0
        %1223 = vmatpush1.msra.mxu0 0.0
        %1224 = vmatprep.subr.mxu0 0.0
        %1225 = vmatpush1.msra.mxu0 0.0
        %1226 = vmatprep.subr.mxu0 0.0
        %1227 = vmatpush1.msra.mxu0 0.0
        %1228 = vmatprep.subr.mxu0 0.0
        %1229 = vmatpush1.msra.mxu0 0.0
        %1230 = vmatprep.subr.mxu0 0.0
        %1231 = vmatpush1.msra.mxu0 0.0
        %1232 = vmatprep.subr.mxu0 0.0
        %1233 = vmatpush1.msra.mxu0 0.0
        %1234 = vmatprep.subr.mxu0 0.0
        %1235 = vmatpush1.msra.mxu0 0.0
        %1236 = vmatprep.subr.mxu0 0.0
        %1237 = vmatpush1.msra.mxu0 0.0
        %1238 = vmatprep.subr.mxu0 0.0
        %1239 = vmatpush1.msra.mxu0 %v1213
        %1240 = vmatprep.subr.mxu0 0.0
        %1241 = vmatpush1.msra.mxu0 %v1212
        %1242 = vmatprep.subr.mxu0 0.0
        %1243 = vmatpush1.msra.mxu0 %v1211
        %1244 = vmatprep.subr.mxu0 0.0
        %1245 = vmatpush1.msra.mxu0 %v1210
        %1246 = vmatprep.subr.mxu0 0.0
        %1247 = vmatpush1.msra.mxu0 %v1209
        %1248 = vmatprep.subr.mxu0 0.0
        %1249 = vmatpush1.msra.mxu0 %v1208
        %1250 = vmatprep.subr.mxu0 0.0
        %1251 = vmatpush1.msra.mxu0 %v1207
        %1252 = vmatprep.subr.mxu0 0.0
        %1253 = vmatpush2.msra.mxu0 0.0
        %1254 = vmatprep.subr.mxu0 0.0
        %1255 = vmatpush2.msra.mxu0 0.0
        %1256 = vmatprep.subr.mxu0 0.0
        %1257 = vmatpush2.msra.mxu0 0.0
        %1258 = vmatprep.subr.mxu0 0.0
        %1259 = vmatpush2.msra.mxu0 0.0
        %1260 = vmatprep.subr.mxu0 0.0
        %1261 = vmatpush2.msra.mxu0 0.0
        %1262 = vmatprep.subr.mxu0 0.0
        %1263 = vmatpush2.msra.mxu0 0.0
        %1264 = vmatprep.subr.mxu0 0.0
        %1265 = vmatpush2.msra.mxu0 0.0
        %1266 = vmatprep.subr.mxu0 0.0
        %1267 = vmatpush2.msra.mxu0 0.0
        %1268 = vmatprep.subr.mxu0 0.0
        %1269 = vmatpush2.msra.mxu0 0.0
        %1270 = vmatprep.subr.mxu0 0.0
        %1271 = vmatpush2.msra.mxu0 0.0
        %1272 = vmatprep.subr.mxu0 0.0
        %1273 = vmatpush2.msra.mxu0 0.0
        %1274 = vmatprep.subr.mxu0 0.0
        %1275 = vmatpush2.msra.mxu0 0.0
        %1276 = vmatprep.subr.mxu0 0.0
        %1277 = vmatpush2.msra.mxu0 0.0
        %1278 = vmatprep.subr.mxu0 0.0
        %1279 = vmatpush2.msra.mxu0 0.0
        %1280 = vmatprep.subr.mxu0 0.0
        %1281 = vmatpush2.msra.mxu0 0.0
        %1282 = vmatprep.subr.mxu0 0.0
        %1283 = vmatpush2.msra.mxu0 0.0
        %1284 = vmatprep.mubr.f32.mxu0 0.0
        %1285 = vmatmul.mubr.f32.gmra.mxu0 %v1215
        %v1286 = vpop.f32.mrf.mxu0
        %v1287 = vadd.f32 0.0, %v1286
        %v1288 = vpop.f32.mrf.mxu0
        %1289 = vmatprep.mubr.f32.mxu0 0.0
        %1290 = vmatmul.mubr.f32.gmra.mxu0 %v1218
        %v1291 = vpop.f32.mrf.mxu0
        %v1292 = vadd.f32 0.0, %v1291
        %v1293 = vpop.f32.mrf.mxu0
        %1294 = vdwg.mxu0
        %v1295 = vadd.f32 %v1196, %v1287
        %v1296 = vadd.f32 %v1201, %v1292
        %v1297 = vld [vmem:[#allocation10] sm:$0x1]
        %v1299 = vlaneseq
        %v1300 = vshrl.u32 %v1299, 7
        %v1301 = vsub.s32 0, %v1300
        %v1302 = vrot.slane %v1297, %v1301
        %v1304 = vadd.f32 %v1295, %v1302
        %v1305 = vadd.f32 %v1296, %v1302
        %v1306 = vld [vmem:[%s6] sm:$0x7f]
        %vm1307 = vcmask 113664
        %v1309 = vsel %vm1307, %v1306, 0
        %vm1311 = vcmask 1045504
        %v1313 = vsel %vm1311, %v1305, 0
        %1315 = vmatprep.subr.mxu0 0.0
        %1316 = vmatpush1.msra.mxu0 0.0
        %1317 = vmatprep.subr.mxu0 0.0
        %1318 = vmatpush1.msra.mxu0 0.0
        %1319 = vmatprep.subr.mxu0 0.0
        %1320 = vmatpush1.msra.mxu0 0.0
        %1321 = vmatprep.subr.mxu0 0.0
        %1322 = vmatpush1.msra.mxu0 0.0
        %1323 = vmatprep.subr.mxu0 0.0
        %1324 = vmatpush1.msra.mxu0 0.0
        %1325 = vmatprep.subr.mxu0 0.0
        %1326 = vmatpush1.msra.mxu0 0.0
        %1327 = vmatprep.subr.mxu0 0.0
        %1328 = vmatpush1.msra.mxu0 0.0
        %1329 = vmatprep.subr.mxu0 0.0
        %1330 = vmatpush1.msra.mxu0 0.0
        %1331 = vmatprep.subr.mxu0 0.0
        %1332 = vmatpush1.msra.mxu0 0.0
        %1333 = vmatprep.subr.mxu0 0.0
        %1334 = vmatpush1.msra.mxu0 0.0
        %1335 = vmatprep.subr.mxu0 0.0
        %1336 = vmatpush1.msra.mxu0 0.0
        %1337 = vmatprep.subr.mxu0 0.0
        %1338 = vmatpush1.msra.mxu0 0.0
        %1339 = vmatprep.subr.mxu0 0.0
        %1340 = vmatpush1.msra.mxu0 0.0
        %1341 = vmatprep.subr.mxu0 0.0
        %1342 = vmatpush1.msra.mxu0 0.0
        %1343 = vmatprep.subr.mxu0 0.0
        %1344 = vmatpush1.msra.mxu0 %v1313
        %1345 = vmatprep.subr.mxu0 0.0
        %1346 = vmatpush1.msra.mxu0 %v1304
        %1347 = vmatprep.subr.mxu0 0.0
        %1348 = vmatpush2.msra.mxu0 0.0
        %1349 = vmatprep.subr.mxu0 0.0
        %1350 = vmatpush2.msra.mxu0 0.0
        %1351 = vmatprep.subr.mxu0 0.0
        %1352 = vmatpush2.msra.mxu0 0.0
        %1353 = vmatprep.subr.mxu0 0.0
        %1354 = vmatpush2.msra.mxu0 0.0
        %1355 = vmatprep.subr.mxu0 0.0
        %1356 = vmatpush2.msra.mxu0 0.0
        %1357 = vmatprep.subr.mxu0 0.0
        %1358 = vmatpush2.msra.mxu0 0.0
        %1359 = vmatprep.subr.mxu0 0.0
        %1360 = vmatpush2.msra.mxu0 0.0
        %1361 = vmatprep.subr.mxu0 0.0
        %1362 = vmatpush2.msra.mxu0 0.0
        %1363 = vmatprep.subr.mxu0 0.0
        %1364 = vmatpush2.msra.mxu0 0.0
        %1365 = vmatprep.subr.mxu0 0.0
        %1366 = vmatpush2.msra.mxu0 0.0
        %1367 = vmatprep.subr.mxu0 0.0
        %1368 = vmatpush2.msra.mxu0 0.0
        %1369 = vmatprep.subr.mxu0 0.0
        %1370 = vmatpush2.msra.mxu0 0.0
        %1371 = vmatprep.subr.mxu0 0.0
        %1372 = vmatpush2.msra.mxu0 0.0
        %1373 = vmatprep.subr.mxu0 0.0
        %1374 = vmatpush2.msra.mxu0 0.0
        %1375 = vmatprep.subr.mxu0 0.0
        %1376 = vmatpush2.msra.mxu0 0.0
        %1377 = vmatprep.subr.mxu0 0.0
        %1378 = vmatpush2.msra.mxu0 0.0
        %1379 = vmatprep.mubr.f32.mxu0 0.0
        %1380 = vmatmul.mubr.f32.gmra.mxu0 %v1309
        %v1381 = vpop.f32.mrf.mxu0
        %v1382 = vadd.f32 0.0, %v1381
        %v1383 = vpop.f32.mrf.mxu0
        %1384 = vdwg.mxu0
        %s1385 = scalar_lea.vmem %s6, 8
        %v1386 = vld [vmem:[%s1385] sm:$0x7f]
        %v1388 = vsel %vm1307, %v1386, 0
        %1390 = vmatprep.subr.mxu0 0.0
        %1391 = vmatpush1.msra.mxu0 0.0
        %1392 = vmatprep.subr.mxu0 0.0
        %1393 = vmatpush1.msra.mxu0 0.0
        %1394 = vmatprep.subr.mxu0 0.0
        %1395 = vmatpush1.msra.mxu0 0.0
        %1396 = vmatprep.subr.mxu0 0.0
        %1397 = vmatpush1.msra.mxu0 0.0
        %1398 = vmatprep.subr.mxu0 0.0
        %1399 = vmatpush1.msra.mxu0 0.0
        %1400 = vmatprep.subr.mxu0 0.0
        %1401 = vmatpush1.msra.mxu0 0.0
        %1402 = vmatprep.subr.mxu0 0.0
        %1403 = vmatpush1.msra.mxu0 0.0
        %1404 = vmatprep.subr.mxu0 0.0
        %1405 = vmatpush1.msra.mxu0 0.0
        %1406 = vmatprep.subr.mxu0 0.0
        %1407 = vmatpush1.msra.mxu0 0.0
        %1408 = vmatprep.subr.mxu0 0.0
        %1409 = vmatpush1.msra.mxu0 0.0
        %1410 = vmatprep.subr.mxu0 0.0
        %1411 = vmatpush1.msra.mxu0 0.0
        %1412 = vmatprep.subr.mxu0 0.0
        %1413 = vmatpush1.msra.mxu0 0.0
        %1414 = vmatprep.subr.mxu0 0.0
        %1415 = vmatpush1.msra.mxu0 0.0
        %1416 = vmatprep.subr.mxu0 0.0
        %1417 = vmatpush1.msra.mxu0 0.0
        %1418 = vmatprep.subr.mxu0 0.0
        %1419 = vmatpush1.msra.mxu0 %v1313
        %1420 = vmatprep.subr.mxu0 0.0
        %1421 = vmatpush1.msra.mxu0 %v1304
        %1422 = vmatprep.subr.mxu0 0.0
        %1423 = vmatpush2.msra.mxu0 0.0
        %1424 = vmatprep.subr.mxu0 0.0
        %1425 = vmatpush2.msra.mxu0 0.0
        %1426 = vmatprep.subr.mxu0 0.0
        %1427 = vmatpush2.msra.mxu0 0.0
        %1428 = vmatprep.subr.mxu0 0.0
        %1429 = vmatpush2.msra.mxu0 0.0
        %1430 = vmatprep.subr.mxu0 0.0
        %1431 = vmatpush2.msra.mxu0 0.0
        %1432 = vmatprep.subr.mxu0 0.0
        %1433 = vmatpush2.msra.mxu0 0.0
        %1434 = vmatprep.subr.mxu0 0.0
        %1435 = vmatpush2.msra.mxu0 0.0
        %1436 = vmatprep.subr.mxu0 0.0
        %1437 = vmatpush2.msra.mxu0 0.0
        %1438 = vmatprep.subr.mxu0 0.0
        %1439 = vmatpush2.msra.mxu0 0.0
        %1440 = vmatprep.subr.mxu0 0.0
        %1441 = vmatpush2.msra.mxu0 0.0
        %1442 = vmatprep.subr.mxu0 0.0
        %1443 = vmatpush2.msra.mxu0 0.0
        %1444 = vmatprep.subr.mxu0 0.0
        %1445 = vmatpush2.msra.mxu0 0.0
        %1446 = vmatprep.subr.mxu0 0.0
        %1447 = vmatpush2.msra.mxu0 0.0
        %1448 = vmatprep.subr.mxu0 0.0
        %1449 = vmatpush2.msra.mxu0 0.0
        %1450 = vmatprep.subr.mxu0 0.0
        %1451 = vmatpush2.msra.mxu0 0.0
        %1452 = vmatprep.subr.mxu0 0.0
        %1453 = vmatpush2.msra.mxu0 0.0
        %1454 = vmatprep.mubr.f32.mxu0 0.0
        %1455 = vmatmul.mubr.f32.gmra.mxu0 %v1388
        %v1456 = vpop.f32.mrf.mxu0
        %v1457 = vadd.f32 0.0, %v1456
        %v1458 = vpop.f32.mrf.mxu0
        %1459 = vdwg.mxu0
        %v1460 = vmax.f32 %v1382, %v1457
        %1462 = vrot.lane.b32.xlu0 %v1460, 72
        %v1463 = vpop.permute.xlu0 %1462
        %v1465 = vmax.f32 %v1460, %v1463
        %v1466 = vmax.f32 %v1465, 0.0
        %1467 = vst.msk [vmem:[#allocation4] sm:$0xff] %vm1017, 0.0
        %vm1468 = vcmask 450560
        %1469 = vst.msk [vmem:[#allocation4 + $0x8] sm:$0x1] %vm1468, 0.0
        %vm1470 = vcmask 456704
        %1471 = vst.msk [vmem:[#allocation4 + $0x1] sm:$0x7f] %vm1470, %v1466
        %v1472 = vld [vmem:[#allocation4] sm:$0x7f]
        %v1473 = vld [vmem:[%s7] sm:$0xff]
        %v1474 = vld [vmem:[%s7 + $0x8] sm:$0xff]
        %v1475 = vld [vmem:[%s7 + $0x10] sm:$0xff]
        %v1476 = vld [vmem:[%s7 + $0x18] sm:$0xff]
        %v1477 = vld [vmem:[%s7 + $0x20] sm:$0xff]
        %v1478 = vld [vmem:[%s7 + $0x28] sm:$0xff]
        %v1479 = vld [vmem:[%s7 + $0x30] sm:$0xff]
        %v1480 = vld [vmem:[#allocation4 + $0x1] sm:$0x7f]
        %s1481 = scalar_lea.vmem %s7, 56
        %v1482 = vld [vmem:[%s1481] sm:$0xff]
        %v1483 = vld [vmem:[%s1481 + $0x8] sm:$0xff]
        %v1484 = vld [vmem:[%s1481 + $0x10] sm:$0xff]
        %v1485 = vld [vmem:[%s1481 + $0x18] sm:$0xff]
        %v1486 = vld [vmem:[%s1481 + $0x20] sm:$0xff]
        %v1487 = vld [vmem:[%s1481 + $0x28] sm:$0xff]
        %v1488 = vld [vmem:[%s1481 + $0x30] sm:$0xff]
        %v1490 = vsel %vm1017, %v1480, 0
        %1492 = vmatprep.subr.mxu0 0.0
        %1493 = vmatpush1.msra.mxu0 0.0
        %1494 = vmatprep.subr.mxu0 0.0
        %1495 = vmatpush1.msra.mxu0 0.0
        %1496 = vmatprep.subr.mxu0 0.0
        %1497 = vmatpush1.msra.mxu0 0.0
        %1498 = vmatprep.subr.mxu0 0.0
        %1499 = vmatpush1.msra.mxu0 0.0
        %1500 = vmatprep.subr.mxu0 0.0
        %1501 = vmatpush1.msra.mxu0 0.0
        %1502 = vmatprep.subr.mxu0 0.0
        %1503 = vmatpush1.msra.mxu0 0.0
        %1504 = vmatprep.subr.mxu0 0.0
        %1505 = vmatpush1.msra.mxu0 0.0
        %1506 = vmatprep.subr.mxu0 0.0
        %1507 = vmatpush1.msra.mxu0 0.0
        %1508 = vmatprep.subr.mxu0 0.0
        %1509 = vmatpush1.msra.mxu0 0.0
        %1510 = vmatprep.subr.mxu0 0.0
        %1511 = vmatpush1.msra.mxu0 %v1488
        %1512 = vmatprep.subr.mxu0 0.0
        %1513 = vmatpush1.msra.mxu0 %v1487
        %1514 = vmatprep.subr.mxu0 0.0
        %1515 = vmatpush1.msra.mxu0 %v1486
        %1516 = vmatprep.subr.mxu0 0.0
        %1517 = vmatpush1.msra.mxu0 %v1485
        %1518 = vmatprep.subr.mxu0 0.0
        %1519 = vmatpush1.msra.mxu0 %v1484
        %1520 = vmatprep.subr.mxu0 0.0
        %1521 = vmatpush1.msra.mxu0 %v1483
        %1522 = vmatprep.subr.mxu0 0.0
        %1523 = vmatpush1.msra.mxu0 %v1482
        %1524 = vmatprep.subr.mxu0 0.0
        %1525 = vmatpush2.msra.mxu0 0.0
        %1526 = vmatprep.subr.mxu0 0.0
        %1527 = vmatpush2.msra.mxu0 0.0
        %1528 = vmatprep.subr.mxu0 0.0
        %1529 = vmatpush2.msra.mxu0 0.0
        %1530 = vmatprep.subr.mxu0 0.0
        %1531 = vmatpush2.msra.mxu0 0.0
        %1532 = vmatprep.subr.mxu0 0.0
        %1533 = vmatpush2.msra.mxu0 0.0
        %1534 = vmatprep.subr.mxu0 0.0
        %1535 = vmatpush2.msra.mxu0 0.0
        %1536 = vmatprep.subr.mxu0 0.0
        %1537 = vmatpush2.msra.mxu0 0.0
        %1538 = vmatprep.subr.mxu0 0.0
        %1539 = vmatpush2.msra.mxu0 0.0
        %1540 = vmatprep.subr.mxu0 0.0
        %1541 = vmatpush2.msra.mxu0 0.0
        %1542 = vmatprep.subr.mxu0 0.0
        %1543 = vmatpush2.msra.mxu0 0.0
        %1544 = vmatprep.subr.mxu0 0.0
        %1545 = vmatpush2.msra.mxu0 0.0
        %1546 = vmatprep.subr.mxu0 0.0
        %1547 = vmatpush2.msra.mxu0 0.0
        %1548 = vmatprep.subr.mxu0 0.0
        %1549 = vmatpush2.msra.mxu0 0.0
        %1550 = vmatprep.subr.mxu0 0.0
        %1551 = vmatpush2.msra.mxu0 0.0
        %1552 = vmatprep.subr.mxu0 0.0
        %1553 = vmatpush2.msra.mxu0 0.0
        %1554 = vmatprep.subr.mxu0 0.0
        %1555 = vmatpush2.msra.mxu0 0.0
        %1556 = vmatprep.mubr.f32.mxu0 0.0
        %1557 = vmatmul.mubr.f32.gmra.mxu0 %v1490
        %v1558 = vpop.f32.mrf.mxu0
        %v1559 = vadd.f32 0.0, %v1558
        %v1560 = vpop.f32.mrf.mxu0
        %1561 = vdwg.mxu0
        %v1563 = vsel %vm1017, %v1472, 0
        %1565 = vmatprep.subr.mxu0 0.0
        %1566 = vmatpush1.msra.mxu0 0.0
        %1567 = vmatprep.subr.mxu0 0.0
        %1568 = vmatpush1.msra.mxu0 0.0
        %1569 = vmatprep.subr.mxu0 0.0
        %1570 = vmatpush1.msra.mxu0 0.0
        %1571 = vmatprep.subr.mxu0 0.0
        %1572 = vmatpush1.msra.mxu0 0.0
        %1573 = vmatprep.subr.mxu0 0.0
        %1574 = vmatpush1.msra.mxu0 0.0
        %1575 = vmatprep.subr.mxu0 0.0
        %1576 = vmatpush1.msra.mxu0 0.0
        %1577 = vmatprep.subr.mxu0 0.0
        %1578 = vmatpush1.msra.mxu0 0.0
        %1579 = vmatprep.subr.mxu0 0.0
        %1580 = vmatpush1.msra.mxu0 0.0
        %1581 = vmatprep.subr.mxu0 0.0
        %1582 = vmatpush1.msra.mxu0 0.0
        %1583 = vmatprep.subr.mxu0 0.0
        %1584 = vmatpush1.msra.mxu0 %v1479
        %1585 = vmatprep.subr.mxu0 0.0
        %1586 = vmatpush1.msra.mxu0 %v1478
        %1587 = vmatprep.subr.mxu0 0.0
        %1588 = vmatpush1.msra.mxu0 %v1477
        %1589 = vmatprep.subr.mxu0 0.0
        %1590 = vmatpush1.msra.mxu0 %v1476
        %1591 = vmatprep.subr.mxu0 0.0
        %1592 = vmatpush1.msra.mxu0 %v1475
        %1593 = vmatprep.subr.mxu0 0.0
        %1594 = vmatpush1.msra.mxu0 %v1474
        %1595 = vmatprep.subr.mxu0 0.0
        %1596 = vmatpush1.msra.mxu0 %v1473
        %1597 = vmatprep.subr.mxu0 0.0
        %1598 = vmatpush2.msra.mxu0 0.0
        %1599 = vmatprep.subr.mxu0 0.0
        %1600 = vmatpush2.msra.mxu0 0.0
        %1601 = vmatprep.subr.mxu0 0.0
        %1602 = vmatpush2.msra.mxu0 0.0
        %1603 = vmatprep.subr.mxu0 0.0
        %1604 = vmatpush2.msra.mxu0 0.0
        %1605 = vmatprep.subr.mxu0 0.0
        %1606 = vmatpush2.msra.mxu0 0.0
        %1607 = vmatprep.subr.mxu0 0.0
        %1608 = vmatpush2.msra.mxu0 0.0
        %1609 = vmatprep.subr.mxu0 0.0
        %1610 = vmatpush2.msra.mxu0 0.0
        %1611 = vmatprep.subr.mxu0 0.0
        %1612 = vmatpush2.msra.mxu0 0.0
        %1613 = vmatprep.subr.mxu0 0.0
        %1614 = vmatpush2.msra.mxu0 0.0
        %1615 = vmatprep.subr.mxu0 0.0
        %1616 = vmatpush2.msra.mxu0 0.0
        %1617 = vmatprep.subr.mxu0 0.0
        %1618 = vmatpush2.msra.mxu0 0.0
        %1619 = vmatprep.subr.mxu0 0.0
        %1620 = vmatpush2.msra.mxu0 0.0
        %1621 = vmatprep.subr.mxu0 0.0
        %1622 = vmatpush2.msra.mxu0 0.0
        %1623 = vmatprep.subr.mxu0 0.0
        %1624 = vmatpush2.msra.mxu0 0.0
        %1625 = vmatprep.subr.mxu0 0.0
        %1626 = vmatpush2.msra.mxu0 0.0
        %1627 = vmatprep.subr.mxu0 0.0
        %1628 = vmatpush2.msra.mxu0 0.0
        %1629 = vmatprep.mubr.f32.mxu0 0.0
        %1630 = vmatmul.mubr.f32.gmra.mxu0 %v1563
        %v1631 = vpop.f32.mrf.mxu0
        %v1632 = vadd.f32 %v1559, %v1631
        %v1633 = vpop.f32.mrf.mxu0
        %1634 = vdwg.mxu0
        %v1635 = vld [vmem:[#allocation4 + $0x2] sm:$0x7f]
        %s1636 = scalar_lea.vmem %s7, 112
        %v1637 = vld [vmem:[%s1636] sm:$0xff]
        %v1638 = vld [vmem:[%s1636 + $0x8] sm:$0xff]
        %v1639 = vld [vmem:[%s1636 + $0x10] sm:$0xff]
        %v1640 = vld [vmem:[%s1636 + $0x18] sm:$0xff]
        %v1641 = vld [vmem:[%s1636 + $0x20] sm:$0xff]
        %v1642 = vld [vmem:[%s1636 + $0x28] sm:$0xff]
        %v1643 = vld [vmem:[%s1636 + $0x30] sm:$0xff]
        %v1645 = vsel %vm1017, %v1635, 0
        %1647 = vmatprep.subr.mxu0 0.0
        %1648 = vmatpush1.msra.mxu0 0.0
        %1649 = vmatprep.subr.mxu0 0.0
        %1650 = vmatpush1.msra.mxu0 0.0
        %1651 = vmatprep.subr.mxu0 0.0
        %1652 = vmatpush1.msra.mxu0 0.0
        %1653 = vmatprep.subr.mxu0 0.0
        %1654 = vmatpush1.msra.mxu0 0.0
        %1655 = vmatprep.subr.mxu0 0.0
        %1656 = vmatpush1.msra.mxu0 0.0
        %1657 = vmatprep.subr.mxu0 0.0
        %1658 = vmatpush1.msra.mxu0 0.0
        %1659 = vmatprep.subr.mxu0 0.0
        %1660 = vmatpush1.msra.mxu0 0.0
        %1661 = vmatprep.subr.mxu0 0.0
        %1662 = vmatpush1.msra.mxu0 0.0
        %1663 = vmatprep.subr.mxu0 0.0
        %1664 = vmatpush1.msra.mxu0 0.0
        %1665 = vmatprep.subr.mxu0 0.0
        %1666 = vmatpush1.msra.mxu0 %v1643
        %1667 = vmatprep.subr.mxu0 0.0
        %1668 = vmatpush1.msra.mxu0 %v1642
        %1669 = vmatprep.subr.mxu0 0.0
        %1670 = vmatpush1.msra.mxu0 %v1641
        %1671 = vmatprep.subr.mxu0 0.0
        %1672 = vmatpush1.msra.mxu0 %v1640
        %1673 = vmatprep.subr.mxu0 0.0
        %1674 = vmatpush1.msra.mxu0 %v1639
        %1675 = vmatprep.subr.mxu0 0.0
        %1676 = vmatpush1.msra.mxu0 %v1638
        %1677 = vmatprep.subr.mxu0 0.0
        %1678 = vmatpush1.msra.mxu0 %v1637
        %1679 = vmatprep.subr.mxu0 0.0
        %1680 = vmatpush2.msra.mxu0 0.0
        %1681 = vmatprep.subr.mxu0 0.0
        %1682 = vmatpush2.msra.mxu0 0.0
        %1683 = vmatprep.subr.mxu0 0.0
        %1684 = vmatpush2.msra.mxu0 0.0
        %1685 = vmatprep.subr.mxu0 0.0
        %1686 = vmatpush2.msra.mxu0 0.0
        %1687 = vmatprep.subr.mxu0 0.0
        %1688 = vmatpush2.msra.mxu0 0.0
        %1689 = vmatprep.subr.mxu0 0.0
        %1690 = vmatpush2.msra.mxu0 0.0
        %1691 = vmatprep.subr.mxu0 0.0
        %1692 = vmatpush2.msra.mxu0 0.0
        %1693 = vmatprep.subr.mxu0 0.0
        %1694 = vmatpush2.msra.mxu0 0.0
        %1695 = vmatprep.subr.mxu0 0.0
        %1696 = vmatpush2.msra.mxu0 0.0
        %1697 = vmatprep.subr.mxu0 0.0
        %1698 = vmatpush2.msra.mxu0 0.0
        %1699 = vmatprep.subr.mxu0 0.0
        %1700 = vmatpush2.msra.mxu0 0.0
        %1701 = vmatprep.subr.mxu0 0.0
        %1702 = vmatpush2.msra.mxu0 0.0
        %1703 = vmatprep.subr.mxu0 0.0
        %1704 = vmatpush2.msra.mxu0 0.0
        %1705 = vmatprep.subr.mxu0 0.0
        %1706 = vmatpush2.msra.mxu0 0.0
        %1707 = vmatprep.subr.mxu0 0.0
        %1708 = vmatpush2.msra.mxu0 0.0
        %1709 = vmatprep.subr.mxu0 0.0
        %1710 = vmatpush2.msra.mxu0 0.0
        %1711 = vmatprep.mubr.f32.mxu0 0.0
        %1712 = vmatmul.mubr.f32.gmra.mxu0 %v1645
        %v1713 = vpop.f32.mrf.mxu0
        %v1714 = vadd.f32 0.0, %v1713
        %v1715 = vpop.f32.mrf.mxu0
        %1716 = vdwg.mxu0
        %v1717 = vadd.f32 %v1632, %v1714
        %v1718 = vld [vmem:[#allocation11] sm:$0x1]
        %v1720 = vlaneseq
        %v1721 = vshrl.u32 %v1720, 7
        %v1722 = vsub.s32 0, %v1721
        %v1723 = vrot.slane %v1718, %v1722
        %v1725 = vadd.f32 %v1717, %v1723
        %v1726 = vld [vmem:[%s9] sm:$0x7]
        %vm1727 = vcmask 56320
        %v1729 = vsel %vm1727, %v1726, 0
        %vm1731 = vcmask 1046528
        %v1733 = vsel %vm1731, %v1725, 0
        %1735 = vmatprep.subr.mxu0 0.0
        %1736 = vmatpush1.msra.mxu0 0.0
        %1737 = vmatprep.subr.mxu0 0.0
        %1738 = vmatpush1.msra.mxu0 0.0
        %1739 = vmatprep.subr.mxu0 0.0
        %1740 = vmatpush1.msra.mxu0 0.0
        %1741 = vmatprep.subr.mxu0 0.0
        %1742 = vmatpush1.msra.mxu0 0.0
        %1743 = vmatprep.subr.mxu0 0.0
        %1744 = vmatpush1.msra.mxu0 0.0
        %1745 = vmatprep.subr.mxu0 0.0
        %1746 = vmatpush1.msra.mxu0 0.0
        %1747 = vmatprep.subr.mxu0 0.0
        %1748 = vmatpush1.msra.mxu0 0.0
        %1749 = vmatprep.subr.mxu0 0.0
        %1750 = vmatpush1.msra.mxu0 0.0
        %1751 = vmatprep.subr.mxu0 0.0
        %1752 = vmatpush1.msra.mxu0 0.0
        %1753 = vmatprep.subr.mxu0 0.0
        %1754 = vmatpush1.msra.mxu0 0.0
        %1755 = vmatprep.subr.mxu0 0.0
        %1756 = vmatpush1.msra.mxu0 0.0
        %1757 = vmatprep.subr.mxu0 0.0
        %1758 = vmatpush1.msra.mxu0 0.0
        %1759 = vmatprep.subr.mxu0 0.0
        %1760 = vmatpush1.msra.mxu0 0.0
        %1761 = vmatprep.subr.mxu0 0.0
        %1762 = vmatpush1.msra.mxu0 0.0
        %1763 = vmatprep.subr.mxu0 0.0
        %1764 = vmatpush1.msra.mxu0 0.0
        %1765 = vmatprep.subr.mxu0 0.0
        %1766 = vmatpush1.msra.mxu0 %v1733
        %1767 = vmatprep.subr.mxu0 0.0
        %1768 = vmatpush2.msra.mxu0 0.0
        %1769 = vmatprep.subr.mxu0 0.0
        %1770 = vmatpush2.msra.mxu0 0.0
        %1771 = vmatprep.subr.mxu0 0.0
        %1772 = vmatpush2.msra.mxu0 0.0
        %1773 = vmatprep.subr.mxu0 0.0
        %1774 = vmatpush2.msra.mxu0 0.0
        %1775 = vmatprep.subr.mxu0 0.0
        %1776 = vmatpush2.msra.mxu0 0.0
        %1777 = vmatprep.subr.mxu0 0.0
        %1778 = vmatpush2.msra.mxu0 0.0
        %1779 = vmatprep.subr.mxu0 0.0
        %1780 = vmatpush2.msra.mxu0 0.0
        %1781 = vmatprep.subr.mxu0 0.0
        %1782 = vmatpush2.msra.mxu0 0.0
        %1783 = vmatprep.subr.mxu0 0.0
        %1784 = vmatpush2.msra.mxu0 0.0
        %1785 = vmatprep.subr.mxu0 0.0
        %1786 = vmatpush2.msra.mxu0 0.0
        %1787 = vmatprep.subr.mxu0 0.0
        %1788 = vmatpush2.msra.mxu0 0.0
        %1789 = vmatprep.subr.mxu0 0.0
        %1790 = vmatpush2.msra.mxu0 0.0
        %1791 = vmatprep.subr.mxu0 0.0
        %1792 = vmatpush2.msra.mxu0 0.0
        %1793 = vmatprep.subr.mxu0 0.0
        %1794 = vmatpush2.msra.mxu0 0.0
        %1795 = vmatprep.subr.mxu0 0.0
        %1796 = vmatpush2.msra.mxu0 0.0
        %1797 = vmatprep.subr.mxu0 0.0
        %1798 = vmatpush2.msra.mxu0 0.0
        %1799 = vmatprep.mubr.f32.mxu0 0.0
        %1800 = vmatmul.mubr.f32.gmra.mxu0 %v1729
        %v1801 = vpop.f32.mrf.mxu0
        %v1802 = vadd.f32 0.0, %v1801
        %v1803 = vpop.f32.mrf.mxu0
        %1804 = vdwg.mxu0
        %s1805 = scalar_lea.vmem %s9, 4
        %v1806 = vld [vmem:[%s1805] sm:$0x7]
        %v1808 = vsel %vm1727, %v1806, 0
        %1810 = vmatprep.subr.mxu0 0.0
        %1811 = vmatpush1.msra.mxu0 0.0
        %1812 = vmatprep.subr.mxu0 0.0
        %1813 = vmatpush1.msra.mxu0 0.0
        %1814 = vmatprep.subr.mxu0 0.0
        %1815 = vmatpush1.msra.mxu0 0.0
        %1816 = vmatprep.subr.mxu0 0.0
        %1817 = vmatpush1.msra.mxu0 0.0
        %1818 = vmatprep.subr.mxu0 0.0
        %1819 = vmatpush1.msra.mxu0 0.0
        %1820 = vmatprep.subr.mxu0 0.0
        %1821 = vmatpush1.msra.mxu0 0.0
        %1822 = vmatprep.subr.mxu0 0.0
        %1823 = vmatpush1.msra.mxu0 0.0
        %1824 = vmatprep.subr.mxu0 0.0
        %1825 = vmatpush1.msra.mxu0 0.0
        %1826 = vmatprep.subr.mxu0 0.0
        %1827 = vmatpush1.msra.mxu0 0.0
        %1828 = vmatprep.subr.mxu0 0.0
        %1829 = vmatpush1.msra.mxu0 0.0
        %1830 = vmatprep.subr.mxu0 0.0
        %1831 = vmatpush1.msra.mxu0 0.0
        %1832 = vmatprep.subr.mxu0 0.0
        %1833 = vmatpush1.msra.mxu0 0.0
        %1834 = vmatprep.subr.mxu0 0.0
        %1835 = vmatpush1.msra.mxu0 0.0
        %1836 = vmatprep.subr.mxu0 0.0
        %1837 = vmatpush1.msra.mxu0 0.0
        %1838 = vmatprep.subr.mxu0 0.0
        %1839 = vmatpush1.msra.mxu0 0.0
        %1840 = vmatprep.subr.mxu0 0.0
        %1841 = vmatpush1.msra.mxu0 %v1733
        %1842 = vmatprep.subr.mxu0 0.0
        %1843 = vmatpush2.msra.mxu0 0.0
        %1844 = vmatprep.subr.mxu0 0.0
        %1845 = vmatpush2.msra.mxu0 0.0
        %1846 = vmatprep.subr.mxu0 0.0
        %1847 = vmatpush2.msra.mxu0 0.0
        %1848 = vmatprep.subr.mxu0 0.0
        %1849 = vmatpush2.msra.mxu0 0.0
        %1850 = vmatprep.subr.mxu0 0.0
        %1851 = vmatpush2.msra.mxu0 0.0
        %1852 = vmatprep.subr.mxu0 0.0
        %1853 = vmatpush2.msra.mxu0 0.0
        %1854 = vmatprep.subr.mxu0 0.0
        %1855 = vmatpush2.msra.mxu0 0.0
        %1856 = vmatprep.subr.mxu0 0.0
        %1857 = vmatpush2.msra.mxu0 0.0
        %1858 = vmatprep.subr.mxu0 0.0
        %1859 = vmatpush2.msra.mxu0 0.0
        %1860 = vmatprep.subr.mxu0 0.0
        %1861 = vmatpush2.msra.mxu0 0.0
        %1862 = vmatprep.subr.mxu0 0.0
        %1863 = vmatpush2.msra.mxu0 0.0
        %1864 = vmatprep.subr.mxu0 0.0
        %1865 = vmatpush2.msra.mxu0 0.0
        %1866 = vmatprep.subr.mxu0 0.0
        %1867 = vmatpush2.msra.mxu0 0.0
        %1868 = vmatprep.subr.mxu0 0.0
        %1869 = vmatpush2.msra.mxu0 0.0
        %1870 = vmatprep.subr.mxu0 0.0
        %1871 = vmatpush2.msra.mxu0 0.0
        %1872 = vmatprep.subr.mxu0 0.0
        %1873 = vmatpush2.msra.mxu0 0.0
        %1874 = vmatprep.mubr.f32.mxu0 0.0
        %1875 = vmatmul.mubr.f32.gmra.mxu0 %v1808
        %v1876 = vpop.f32.mrf.mxu0
        %v1877 = vadd.f32 0.0, %v1876
        %v1878 = vpop.f32.mrf.mxu0
        %1879 = vdwg.mxu0
        %v1880 = vmax.f32 %v1802, %v1877
        %1882 = vrot.lane.b32.xlu0 %v1880, 80
        %v1883 = vpop.permute.xlu0 %1882
        %v1885 = vmax.f32 %v1880, %v1883
        %v1886 = vmax.f32 %v1885, 0.0
        %v1887 = vld [vmem:[#allocation13] sm:$0x1]
        %v1888 = vld [vmem:[%s10] sm:$0xff]
        %v1889 = vld [vmem:[%s10 + $0x8] sm:$0xff]
        %v1890 = vld [vmem:[%s10 + $0x10] sm:$0xff]
        %v1891 = vld [vmem:[%s10 + $0x18] sm:$0xff]
        %v1892 = vld [vmem:[%s10 + $0x20] sm:$0xff]
        %v1893 = vld [vmem:[%s10 + $0x28] sm:$0xff]
        %vm1894 = vcmask 392192
        %v1896 = vsel %vm1894, %v1886, 0
        %1898 = vmatprep.subr.mxu0 0.0
        %1899 = vmatpush1.msra.mxu0 0.0
        %1900 = vmatprep.subr.mxu0 0.0
        %1901 = vmatpush1.msra.mxu0 0.0
        %1902 = vmatprep.subr.mxu0 0.0
        %1903 = vmatpush1.msra.mxu0 0.0
        %1904 = vmatprep.subr.mxu0 0.0
        %1905 = vmatpush1.msra.mxu0 0.0
        %1906 = vmatprep.subr.mxu0 0.0
        %1907 = vmatpush1.msra.mxu0 0.0
        %1908 = vmatprep.subr.mxu0 0.0
        %1909 = vmatpush1.msra.mxu0 0.0
        %1910 = vmatprep.subr.mxu0 0.0
        %1911 = vmatpush1.msra.mxu0 0.0
        %1912 = vmatprep.subr.mxu0 0.0
        %1913 = vmatpush1.msra.mxu0 0.0
        %1914 = vmatprep.subr.mxu0 0.0
        %1915 = vmatpush1.msra.mxu0 0.0
        %1916 = vmatprep.subr.mxu0 0.0
        %1917 = vmatpush1.msra.mxu0 0.0
        %1918 = vmatprep.subr.mxu0 0.0
        %1919 = vmatpush1.msra.mxu0 %v1893
        %1920 = vmatprep.subr.mxu0 0.0
        %1921 = vmatpush1.msra.mxu0 %v1892
        %1922 = vmatprep.subr.mxu0 0.0
        %1923 = vmatpush1.msra.mxu0 %v1891
        %1924 = vmatprep.subr.mxu0 0.0
        %1925 = vmatpush1.msra.mxu0 %v1890
        %1926 = vmatprep.subr.mxu0 0.0
        %1927 = vmatpush1.msra.mxu0 %v1889
        %1928 = vmatprep.subr.mxu0 0.0
        %1929 = vmatpush1.msra.mxu0 %v1888
        %1930 = vmatprep.subr.mxu0 0.0
        %1931 = vmatpush2.msra.mxu0 0.0
        %1932 = vmatprep.subr.mxu0 0.0
        %1933 = vmatpush2.msra.mxu0 0.0
        %1934 = vmatprep.subr.mxu0 0.0
        %1935 = vmatpush2.msra.mxu0 0.0
        %1936 = vmatprep.subr.mxu0 0.0
        %1937 = vmatpush2.msra.mxu0 0.0
        %1938 = vmatprep.subr.mxu0 0.0
        %1939 = vmatpush2.msra.mxu0 0.0
        %1940 = vmatprep.subr.mxu0 0.0
        %1941 = vmatpush2.msra.mxu0 0.0
        %1942 = vmatprep.subr.mxu0 0.0
        %1943 = vmatpush2.msra.mxu0 0.0
        %1944 = vmatprep.subr.mxu0 0.0
        %1945 = vmatpush2.msra.mxu0 0.0
        %1946 = vmatprep.subr.mxu0 0.0
        %1947 = vmatpush2.msra.mxu0 0.0
        %1948 = vmatprep.subr.mxu0 0.0
        %1949 = vmatpush2.msra.mxu0 0.0
        %1950 = vmatprep.subr.mxu0 0.0
        %1951 = vmatpush2.msra.mxu0 0.0
        %1952 = vmatprep.subr.mxu0 0.0
        %1953 = vmatpush2.msra.mxu0 0.0
        %1954 = vmatprep.subr.mxu0 0.0
        %1955 = vmatpush2.msra.mxu0 0.0
        %1956 = vmatprep.subr.mxu0 0.0
        %1957 = vmatpush2.msra.mxu0 0.0
        %1958 = vmatprep.subr.mxu0 0.0
        %1959 = vmatpush2.msra.mxu0 0.0
        %1960 = vmatprep.subr.mxu0 0.0
        %1961 = vmatpush2.msra.mxu0 0.0
        %1962 = vmatprep.mubr.f32.mxu0 0.0
        %1963 = vmatmul.mubr.f32.gmra.mxu0 %v1896
        %v1964 = vpop.f32.mrf.mxu0
        %v1965 = vadd.f32 0.0, %v1964
        %v1966 = vpop.f32.mrf.mxu0
        %1967 = vdwg.mxu0
        %v1968 = vadd.f32 %v1887, %v1965
        %s1969 = scalar_lea.vmem %s10, 48
        %v1970 = vld [vmem:[%s1969] sm:$0xff]
        %v1971 = vld [vmem:[%s1969 + $0x8] sm:$0xff]
        %v1972 = vld [vmem:[%s1969 + $0x10] sm:$0xff]
        %v1973 = vld [vmem:[%s1969 + $0x18] sm:$0xff]
        %v1974 = vld [vmem:[%s1969 + $0x20] sm:$0xff]
        %v1975 = vld [vmem:[%s1969 + $0x28] sm:$0xff]
        %v1976 = vrot.slane %v1886, 1
        %v1977 = vsel %vm1894, %v1976, 0
        %1979 = vmatprep.subr.mxu0 0.0
        %1980 = vmatpush1.msra.mxu0 0.0
        %1981 = vmatprep.subr.mxu0 0.0
        %1982 = vmatpush1.msra.mxu0 0.0
        %1983 = vmatprep.subr.mxu0 0.0
        %1984 = vmatpush1.msra.mxu0 0.0
        %1985 = vmatprep.subr.mxu0 0.0
        %1986 = vmatpush1.msra.mxu0 0.0
        %1987 = vmatprep.subr.mxu0 0.0
        %1988 = vmatpush1.msra.mxu0 0.0
        %1989 = vmatprep.subr.mxu0 0.0
        %1990 = vmatpush1.msra.mxu0 0.0
        %1991 = vmatprep.subr.mxu0 0.0
        %1992 = vmatpush1.msra.mxu0 0.0
        %1993 = vmatprep.subr.mxu0 0.0
        %1994 = vmatpush1.msra.mxu0 0.0
        %1995 = vmatprep.subr.mxu0 0.0
        %1996 = vmatpush1.msra.mxu0 0.0
        %1997 = vmatprep.subr.mxu0 0.0
        %1998 = vmatpush1.msra.mxu0 0.0
        %1999 = vmatprep.subr.mxu0 0.0
        %2000 = vmatpush1.msra.mxu0 %v1975
        %2001 = vmatprep.subr.mxu0 0.0
        %2002 = vmatpush1.msra.mxu0 %v1974
        %2003 = vmatprep.subr.mxu0 0.0
        %2004 = vmatpush1.msra.mxu0 %v1973
        %2005 = vmatprep.subr.mxu0 0.0
        %2006 = vmatpush1.msra.mxu0 %v1972
        %2007 = vmatprep.subr.mxu0 0.0
        %2008 = vmatpush1.msra.mxu0 %v1971
        %2009 = vmatprep.subr.mxu0 0.0
        %2010 = vmatpush1.msra.mxu0 %v1970
        %2011 = vmatprep.subr.mxu0 0.0
        %2012 = vmatpush2.msra.mxu0 0.0
        %2013 = vmatprep.subr.mxu0 0.0
        %2014 = vmatpush2.msra.mxu0 0.0
        %2015 = vmatprep.subr.mxu0 0.0
        %2016 = vmatpush2.msra.mxu0 0.0
        %2017 = vmatprep.subr.mxu0 0.0
        %2018 = vmatpush2.msra.mxu0 0.0
        %2019 = vmatprep.subr.mxu0 0.0
        %2020 = vmatpush2.msra.mxu0 0.0
        %2021 = vmatprep.subr.mxu0 0.0
        %2022 = vmatpush2.msra.mxu0 0.0
        %2023 = vmatprep.subr.mxu0 0.0
        %2024 = vmatpush2.msra.mxu0 0.0
        %2025 = vmatprep.subr.mxu0 0.0
        %2026 = vmatpush2.msra.mxu0 0.0
        %2027 = vmatprep.subr.mxu0 0.0
        %2028 = vmatpush2.msra.mxu0 0.0
        %2029 = vmatprep.subr.mxu0 0.0
        %2030 = vmatpush2.msra.mxu0 0.0
        %2031 = vmatprep.subr.mxu0 0.0
        %2032 = vmatpush2.msra.mxu0 0.0
        %2033 = vmatprep.subr.mxu0 0.0
        %2034 = vmatpush2.msra.mxu0 0.0
        %2035 = vmatprep.subr.mxu0 0.0
        %2036 = vmatpush2.msra.mxu0 0.0
        %2037 = vmatprep.subr.mxu0 0.0
        %2038 = vmatpush2.msra.mxu0 0.0
        %2039 = vmatprep.subr.mxu0 0.0
        %2040 = vmatpush2.msra.mxu0 0.0
        %2041 = vmatprep.subr.mxu0 0.0
        %2042 = vmatpush2.msra.mxu0 0.0
        %2043 = vmatprep.mubr.f32.mxu0 0.0
        %2044 = vmatmul.mubr.f32.gmra.mxu0 %v1977
        %v2045 = vpop.f32.mrf.mxu0
        %v2046 = vadd.f32 0.0, %v2045
        %v2047 = vpop.f32.mrf.mxu0
        %2048 = vdwg.mxu0
        %v2049 = vadd.f32 %v1968, %v2046
        %s2050 = scalar_lea.vmem %s10, 96
        %v2051 = vld [vmem:[%s2050] sm:$0xff]
        %v2052 = vld [vmem:[%s2050 + $0x8] sm:$0xff]
        %v2053 = vld [vmem:[%s2050 + $0x10] sm:$0xff]
        %v2054 = vld [vmem:[%s2050 + $0x18] sm:$0xff]
        %v2055 = vld [vmem:[%s2050 + $0x20] sm:$0xff]
        %v2056 = vld [vmem:[%s2050 + $0x28] sm:$0xff]
        %v2057 = vrot.slane %v1886, 2
        %v2058 = vsel %vm1894, %v2057, 0
        %2060 = vmatprep.subr.mxu0 0.0
        %2061 = vmatpush1.msra.mxu0 0.0
        %2062 = vmatprep.subr.mxu0 0.0
        %2063 = vmatpush1.msra.mxu0 0.0
        %2064 = vmatprep.subr.mxu0 0.0
        %2065 = vmatpush1.msra.mxu0 0.0
        %2066 = vmatprep.subr.mxu0 0.0
        %2067 = vmatpush1.msra.mxu0 0.0
        %2068 = vmatprep.subr.mxu0 0.0
        %2069 = vmatpush1.msra.mxu0 0.0
        %2070 = vmatprep.subr.mxu0 0.0
        %2071 = vmatpush1.msra.mxu0 0.0
        %2072 = vmatprep.subr.mxu0 0.0
        %2073 = vmatpush1.msra.mxu0 0.0
        %2074 = vmatprep.subr.mxu0 0.0
        %2075 = vmatpush1.msra.mxu0 0.0
        %2076 = vmatprep.subr.mxu0 0.0
        %2077 = vmatpush1.msra.mxu0 0.0
        %2078 = vmatprep.subr.mxu0 0.0
        %2079 = vmatpush1.msra.mxu0 0.0
        %2080 = vmatprep.subr.mxu0 0.0
        %2081 = vmatpush1.msra.mxu0 %v2056
        %2082 = vmatprep.subr.mxu0 0.0
        %2083 = vmatpush1.msra.mxu0 %v2055
        %2084 = vmatprep.subr.mxu0 0.0
        %2085 = vmatpush1.msra.mxu0 %v2054
        %2086 = vmatprep.subr.mxu0 0.0
        %2087 = vmatpush1.msra.mxu0 %v2053
        %2088 = vmatprep.subr.mxu0 0.0
        %2089 = vmatpush1.msra.mxu0 %v2052
        %2090 = vmatprep.subr.mxu0 0.0
        %2091 = vmatpush1.msra.mxu0 %v2051
        %2092 = vmatprep.subr.mxu0 0.0
        %2093 = vmatpush2.msra.mxu0 0.0
        %2094 = vmatprep.subr.mxu0 0.0
        %2095 = vmatpush2.msra.mxu0 0.0
        %2096 = vmatprep.subr.mxu0 0.0
        %2097 = vmatpush2.msra.mxu0 0.0
        %2098 = vmatprep.subr.mxu0 0.0
        %2099 = vmatpush2.msra.mxu0 0.0
        %2100 = vmatprep.subr.mxu0 0.0
        %2101 = vmatpush2.msra.mxu0 0.0
        %2102 = vmatprep.subr.mxu0 0.0
        %2103 = vmatpush2.msra.mxu0 0.0
        %2104 = vmatprep.subr.mxu0 0.0
        %2105 = vmatpush2.msra.mxu0 0.0
        %2106 = vmatprep.subr.mxu0 0.0
        %2107 = vmatpush2.msra.mxu0 0.0
        %2108 = vmatprep.subr.mxu0 0.0
        %2109 = vmatpush2.msra.mxu0 0.0
        %2110 = vmatprep.subr.mxu0 0.0
        %2111 = vmatpush2.msra.mxu0 0.0
        %2112 = vmatprep.subr.mxu0 0.0
        %2113 = vmatpush2.msra.mxu0 0.0
        %2114 = vmatprep.subr.mxu0 0.0
        %2115 = vmatpush2.msra.mxu0 0.0
        %2116 = vmatprep.subr.mxu0 0.0
        %2117 = vmatpush2.msra.mxu0 0.0
        %2118 = vmatprep.subr.mxu0 0.0
        %2119 = vmatpush2.msra.mxu0 0.0
        %2120 = vmatprep.subr.mxu0 0.0
        %2121 = vmatpush2.msra.mxu0 0.0
        %2122 = vmatprep.subr.mxu0 0.0
        %2123 = vmatpush2.msra.mxu0 0.0
        %2124 = vmatprep.mubr.f32.mxu0 0.0
        %2125 = vmatmul.mubr.f32.gmra.mxu0 %v2058
        %v2126 = vpop.f32.mrf.mxu0
        %v2127 = vadd.f32 0.0, %v2126
        %v2128 = vpop.f32.mrf.mxu0
        %2129 = vdwg.mxu0
        %v2130 = vadd.f32 %v2049, %v2127
        %vm2131 = vcmask 73728
        %2132 = vst.msk [vmem:[%s470] sm:$0x1] %vm2131, %v2130
        %s2133 = sand.u32 %s294, 1
        %s2134 = scalar_lea.sflag [#allocation7], %s2133
        %s2135 = sand.u32 %s294, 1
        %s2136 = scalar_lea.vmem [#allocation14], %s2135
        // Predicated region
        $region89: #{simple_cnn_forward.1} parent=67 // pred_check
          %p2137 = pneg %p304
        $region90: #{simple_cnn_forward.1} parent=67 // pred_check_branch
          %2139 = sbr.rel (%p2137) target = $region92
        $region91: #{simple_cnn_forward.1} parent=67 // pred_region
          %s2141 = ssub.s32 16, 16
          %2142 = vsyncadd %s2134, %s2141
          %s2143 = smul.addr %s29, 16
          %s2144 = scalar_lea.hbm %s12, %s2143
          %s2146 = sshll.u32 %s2136, 4
          %s2147 = int_to_ptr.vmem [resolvable:$true] %s2146
          %2149 = dma.vmem_to_hbm [thread:$0]  %s2147, 16, %s2144, %s2134
        $region92: #{simple_cnn_forward.1} parent=67 // pred_fallthru
          _
      $region68: #{simple_cnn_forward.1} parent=5 // pred_fallthru
        _
      %p2150 = scmp.le.s32.totalorder 2, %s24
      // Predicated region
      $region93: #{simple_cnn_forward.1} parent=5 // pred_check
        %p2151 = pneg %p2150
      $region94: #{simple_cnn_forward.1} parent=5 // pred_check_branch
        %2153 = sbr.rel (%p2151) target = $region96
      $region95: #{simple_cnn_forward.1} parent=5 // pred_region
        %s2154 = ssub.s32 %s24, 2
        // Predicated region
        $region97: #{simple_cnn_forward.1} parent=95 // pred_check
          %p2155 = pneg %p310
        $region98: #{simple_cnn_forward.1} parent=95 // pred_check_branch
          %2157 = sbr.rel (%p2155) target = $region100
        $region99: #{simple_cnn_forward.1} parent=95 // pred_region
          %s2158 = sand.u32 %s295, 1
          %s2159 = scalar_lea.sflag [#allocation7], %s2158
          %s2160 = sand.u32 %s295, 1
          %s2161 = scalar_lea.vmem [#allocation14], %s2160
          %2162 = dma.done %s2159, 16
        $region100: #{simple_cnn_forward.1} parent=95 // pred_fallthru
          _
      $region96: #{simple_cnn_forward.1} parent=5 // pred_fallthru
        _
    $region6: #{simple_cnn_forward.1} parent=1 // loop_footer
      %s28 = sadd.s32 1, %s24
    $region7: #{simple_cnn_forward.1} parent=1 // loop_footer_branch
      %23 = sbr.rel target = $region3
    $region8: #{simple_cnn_forward.1} parent=1 // loop_exit
      _
    %2163 = vsyncpa [#allocation6], 1
    %s2164 = scalar_lea.sflag [#allocation6], 1
    %2165 = vsyncpa %s2164, 1
    %2166 = vsyncpa [#allocation9], 1
    %2167 = vsyncpa [#allocation12], 1
    %2168 = vsyncpa [#allocation7], 1
    %s2169 = scalar_lea.sflag [#allocation7], 1
    %2170 = vsyncpa %s2169, 1

</llo_original>
